<compile_context>
chip_gen: v7x
topology: tpu7x:2x2x1
jax: 0.10.0
libtpu: 0.0.40
codegen_flags: <defaults>
</compile_context>

<pallas_src>
import numpy as np
import jax
import jax.numpy as jnp
from jax import lax
from jax.experimental import pallas as pl
from jax.experimental.pallas import tpu as pltpu


# ----------------------------------------------------------------------------
# Kernel.  Grid = (batch, token-tile), both axes "parallel".
#   feat_ref   : (1, TQ, Cp)            image-feature token tile  (cdt)
#   pprojT_ref : (1, C2p, Pp)           transposed prototype projection (cdt)
#   w3cat_ref  : (1, Pp+C2p, C2p)       fused fc3 weight [pproj@W3a^T ; W3b^T]
#   bias_ref   : (1, 1, Pp) f32         additive softmax mask (0 / -1e30)
#   wfT_ref    : (Cp, C2p) cdt          feature_fc weight (pre-transposed)
#   bf_ref,b3_ref,b4_ref : f32 biases
#   w4T_ref    : (C2p, Cp) cdt          fc4 weight (pre-transposed)
#   out_ref    : (1, TQ, Cp)            out_dtype
# ----------------------------------------------------------------------------
def _feature_aug_kernel(feat_ref, pprojT_ref, w3cat_ref, bias_ref,
                        wfT_ref, bf_ref, b3_ref, w4T_ref, b4_ref,
                        out_ref):
    f32 = jnp.float32
    cdt = wfT_ref.dtype                       # matmul-input dtype (bf16 / f32)

    feat = feat_ref[0]                                            # (TQ, Cp)
    feat_proj_f32 = (jnp.dot(feat, wfT_ref[...], preferred_element_type=f32)
                     + bf_ref[...])                               # (TQ, C2p)
    feat_proj = feat_proj_f32.astype(cdt)

    # attention logits: canonical (TQ, C2p) @ (C2p, Pp); additive label mask.
    logits = (jnp.dot(feat_proj, pprojT_ref[0], preferred_element_type=f32)
              + bias_ref[0])                                      # (TQ, Pp)

    # masked softmax over prototypes == softmax over the gathered
    # (nonzero-label) prototype subset in the reference code.  Masked / padded
    # columns carry -1e30, so exp underflows to exactly 0 — no select needed.
    m = jnp.max(logits, axis=-1, keepdims=True)
    e = jnp.exp(logits - m)
    denom = jnp.sum(e, axis=-1, keepdims=True)                    # >= 1 for any
    attn = (e * pl.reciprocal(denom, approx=True)).astype(cdt)    # valid row

    # fused fc3: concat([proto_aug, feat_proj]) @ W3^T + b3
    #          == [attn, feat_proj] @ [pproj@W3a^T ; W3b^T] + b3
    ap = jnp.concatenate([attn, feat_proj], axis=-1)              # (TQ, Pp+C2p)
    feat_agg = (jnp.dot(ap, w3cat_ref[0], preferred_element_type=f32)
                + b3_ref[...])
    feat_agg = jnp.maximum(feat_agg, 0.0).astype(cdt)             # relu

    # relu(features + fc4(feat_agg))
    out = jnp.maximum(
        feat.astype(f32)
        + jnp.dot(feat_agg, w4T_ref[...], preferred_element_type=f32)
        + b4_ref[...],
        0.0)
    out_ref[0] = out.astype(out_ref.dtype)


# ----------------------------------------------------------------------------
# Helpers
# ----------------------------------------------------------------------------
def _round_up(x, m):
    return ((x + m - 1) // m) * m


def _pad_to(a, shape):
    pads = [(0, t - s) for s, t in zip(a.shape, shape)]
    return jnp.pad(a, pads)


def _default_tile_params(c_pad):
    """Generation-aware token tile / VMEM budget (v5e/v6e: 128 MiB VMEM,
    v7x: 64 MiB per TensorCore)."""
    try:
        vmem_cap = pltpu.get_tpu_info().vmem_capacity_bytes
    except Exception:
        vmem_cap = 64 * 1024 * 1024        # conservative (v7x-sized) fallback
    if vmem_cap >= 100 * 1024 * 1024:      # v5e / v6e
        tq_max = 2048 if c_pad <= 512 else 1024
        vmem_limit = 96 * 1024 * 1024
    else:                                  # v7x
        tq_max = 1024 if c_pad <= 256 else 512
        vmem_limit = 48 * 1024 * 1024
    return tq_max, vmem_limit


# ----------------------------------------------------------------------------
# Core entry point: token-major (N, HW, C) features, no layout transposes.
# ----------------------------------------------------------------------------
def feature_aug_tokens(feats, prototypes, labels, params, *,
                       is_global_prototype=False,
                       compute_dtype=jnp.bfloat16,
                       out_dtype=None,
                       tq_max=None,
                       vmem_limit_bytes=None):
    """feats: (N, HW, C); prototypes: (N, P, C) local or (P, C) global;
    labels: (N, P) multi-hot (contract: >= 1 nonzero per row)."""
    n, hw, c = feats.shape
    assert c % 2 == 0
    c2 = c // 2
    f32 = jnp.float32
    cdt = compute_dtype
    out_dtype = feats.dtype if out_dtype is None else out_dtype

    # Lane-dense channel padding (no-op when C, C2 already multiples of 128).
    c_pad = _round_up(c, 128)
    c2_pad = _round_up(c2, 128)

    if tq_max is None or vmem_limit_bytes is None:
        d_tq, d_vmem = _default_tile_params(c_pad)
        tq_max = d_tq if tq_max is None else tq_max
        vmem_limit_bytes = d_vmem if vmem_limit_bytes is None else vmem_limit_bytes

    # ---- token (HW) tiling: bounded VMEM + real pipelining -----------------
    if hw <= tq_max:
        tq, hw_pad = hw, hw
    else:
        tq = tq_max                          # multiple of 8
        hw_pad = _round_up(hw, tq)
    nq = hw_pad // tq

    feats_p = feats
    if hw_pad != hw or c_pad != c:
        feats_p = jnp.pad(feats, ((0, 0), (0, hw_pad - hw), (0, c_pad - c)))
    feats_p = feats_p.astype(cdt)

    # ---- per-sample (or global) prototype work, hoisted out of the kernel --
    # pproj = prototypes @ Wp^T + bp; pw3a = pproj @ W3a^T (fc3 fold).
    # Tiny matmuls; computed once in f32, cast to compute dtype.
    proto = prototypes.reshape(1, -1, c) if is_global_prototype else prototypes
    p = proto.shape[1]
    p_pad = _round_up(p, 128)
    hp = lax.Precision.HIGHEST

    wp = params["wp"].astype(f32)            # (C2, C)
    bp = params["bp"].astype(f32)            # (C2,)
    w3 = params["w3"].astype(f32)            # (C2, C)
    w3a, w3b = w3[:, :c2], w3[:, c2:]        # prototype half / feature half

    pproj = jnp.einsum("bpc,dc->bpd", proto.astype(f32), wp, precision=hp) + bp
    pw3a = jnp.einsum("bpd,ed->bpe", pproj, w3a, precision=hp)     # (B, P, C2)
    bsz = pproj.shape[0]

    # transposed attention RHS (canonical contraction in the kernel)
    pprojT = jnp.transpose(pproj, (0, 2, 1))                       # (B, C2, P)
    pprojT = _pad_to(pprojT, (bsz, c2_pad, p_pad)).astype(cdt)

    # fused fc3 weight: [pw3a ; W3b^T]
    pw3a = _pad_to(pw3a, (bsz, p_pad, c2_pad))
    w3bT = _pad_to(w3b.T, (c2_pad, c2_pad))
    w3cat = jnp.concatenate(
        [pw3a, jnp.broadcast_to(w3bT[None], (bsz, c2_pad, c2_pad))],
        axis=1).astype(cdt)                                        # (B, Pp+C2p, C2p)

    # additive softmax mask: 0 for active labels, -1e30 otherwise / padding.
    lab = _pad_to(labels.astype(f32), (n, p_pad))
    mask_bias = jnp.where(lab > 0, 0.0, -1e30).astype(f32).reshape(n, 1, p_pad)

    # ---- resident weights / biases (pre-transposed to [in, out]) -----------
    wfT = _pad_to(params["wf"].astype(f32).T, (c_pad, c2_pad)).astype(cdt)
    bf = _pad_to(params["bf"].astype(f32).reshape(1, c2), (1, c2_pad))
    b3 = _pad_to(params["b3"].astype(f32).reshape(1, c2), (1, c2_pad))
    w4T = _pad_to(params["w4"].astype(f32).T, (c2_pad, c_pad)).astype(cdt)
    b4 = _pad_to(params["b4"].astype(f32).reshape(1, c), (1, c_pad))

    per_sample = lambda i, q: (i, 0, 0)
    shared = lambda i, q: (0, 0, 0)
    proto_map = shared if is_global_prototype else per_sample

    def run(single_buffer_weights):
        def resident(shape):
            idx = lambda i, q: (0,) * len(shape)
            if single_buffer_weights:
                try:
                    # constant block index -> a single VMEM buffer suffices;
                    # saves VMEM vs. default double-buffering (matters on v7x)
                    return pl.BlockSpec(shape, idx, pipeline_mode=pl.Buffered(1))
                except Exception:
                    pass
            return pl.BlockSpec(shape, idx)

        return pl.pallas_call(
            _feature_aug_kernel,
            out_shape=jax.ShapeDtypeStruct((n, hw_pad, c_pad), out_dtype),
            grid=(n, nq),
            in_specs=[
                pl.BlockSpec((1, tq, c_pad), lambda i, q: (i, q, 0)),      # feats
                pl.BlockSpec((1, c2_pad, p_pad), proto_map),               # pproj^T
                pl.BlockSpec((1, p_pad + c2_pad, c2_pad), proto_map),      # fused fc3
                pl.BlockSpec((1, 1, p_pad), per_sample),                   # mask bias
                resident((c_pad, c2_pad)), resident((1, c2_pad)),          # feature_fc
                resident((1, c2_pad)),                                     # b3
                resident((c2_pad, c_pad)), resident((1, c_pad)),           # fc4
            ],
            out_specs=pl.BlockSpec((1, tq, c_pad), lambda i, q: (i, q, 0)),
            compiler_params=pltpu.CompilerParams(
                dimension_semantics=("parallel", "parallel"),
                vmem_limit_bytes=vmem_limit_bytes),
        )(feats_p, pprojT, w3cat, mask_bias, wfT, bf, b3, w4T, b4)

    try:
        out = run(True)
    except Exception:
        # pipeline_mode=pl.Buffered(1) not supported by this jax/Mosaic build;
        # fall back to default double-buffered resident weights.
        out = run(False)

    if hw_pad != hw or c_pad != c:
        out = out[:, :hw, :c]
    return out


# ----------------------------------------------------------------------------
# NCHW compatibility wrapper (matches the PyTorch module's interface).
# The transposes here are pure layout plumbing; a fused pipeline should call
# feature_aug_tokens directly with (N, HW, C) features to avoid them.
# ----------------------------------------------------------------------------
def feature_aug_forward(x_nchw, prototypes, labels, params, *,
                        is_global_prototype=False,
                        compute_dtype=jnp.bfloat16,
                        out_dtype=None, **kwargs):
    n, c, h, w = x_nchw.shape
    feats = jnp.transpose(x_nchw, (0, 2, 3, 1)).reshape(n, h * w, c)
    out = feature_aug_tokens(feats, prototypes, labels, params,
                             is_global_prototype=is_global_prototype,
                             compute_dtype=compute_dtype,
                             out_dtype=out_dtype, **kwargs)
    return jnp.transpose(out.reshape(n, h, w, c), (0, 3, 1, 2))


# ----------------------------------------------------------------------------
# Deterministic parameter init (matches torch nn.Linear shapes / default init)
# ----------------------------------------------------------------------------
def init_params(key, dim):
    c2 = dim // 2

    def linear(k, out_f, in_f):
        k1, k2 = jax.random.split(k)
        bound = 1.0 / np.sqrt(in_f)
        w = jax.random.uniform(k1, (out_f, in_f), jnp.float32, -bound, bound)
        b = jax.random.uniform(k2, (out_f,), jnp.float32, -bound, bound)
        return w, b

    keys = jax.random.split(key, 4)
    wp, bp = linear(keys[0], c2, dim)     # prototype_fc
    wf, bf = linear(keys[1], c2, dim)     # feature_fc
    w3, b3 = linear(keys[2], c2, dim)     # fc3
    w4, b4 = linear(keys[3], dim, c2)     # fc4
    return dict(wp=wp, bp=bp, wf=wf, bf=bf, w3=w3, b3=b3, w4=w4, b4=b4)


# ----------------------------------------------------------------------------
# NumPy reference reproducing the PyTorch *_prototype_based_feature_aug
# (training path: indices = nonzero(labels[i]))
# ----------------------------------------------------------------------------
def numpy_reference(x, prototypes, labels, params, is_global=False):
    x = np.asarray(x, np.float32)
    prototypes = np.asarray(prototypes, np.float32)
    labels = np.asarray(labels)
    wp, bp = np.asarray(params["wp"], np.float32), np.asarray(params["bp"], np.float32)
    wf, bf = np.asarray(params["wf"], np.float32), np.asarray(params["bf"], np.float32)
    w3, b3 = np.asarray(params["w3"], np.float32), np.asarray(params["b3"], np.float32)
    w4, b4 = np.asarray(params["w4"], np.float32), np.asarray(params["b4"], np.float32)

    n, c, h, w = x.shape
    feats = np.transpose(x, (0, 2, 3, 1)).reshape(n, h * w, c)
    outs = []
    for i in range(n):
        idx = np.nonzero(labels[i])[0]
        bank = prototypes if is_global else prototypes[i]
        cur_proto = bank[idx].reshape(-1, c)
        feature = feats[i]
        proto_proj = cur_proto @ wp.T + bp
        feat_proj = feature @ wf.T + bf
        att = feat_proj @ proto_proj.T
        att = att - att.max(axis=1, keepdims=True)
        att = np.exp(att)
        att = att / att.sum(axis=1, keepdims=True)
        proto_aug = att @ proto_proj
        cat = np.concatenate([proto_aug, feat_proj], axis=-1)
        outs.append(np.maximum(cat @ w3.T + b3, 0.0))
    agg = np.stack(outs)
    agg = np.maximum(feats + agg @ w4.T + b4, 0.0)
    return np.transpose(agg.reshape(n, h, w, c), (0, 3, 1, 2))


def _bf16_round(a):
    return np.asarray(jnp.asarray(a).astype(jnp.bfloat16).astype(jnp.float32))


if __name__ == "__main__":
    # Small shapes consistent with the module: prototype.dim = 32 channels,
    # 8x8 spatial, batch 2, num_classes 8.
    N, C, H, W = 2, 32, 8, 8
    P = 8  # num_classes

    key = jax.random.PRNGKey(0)
    kx, kp, kg, kparam = jax.random.split(key, 4)

    x = jax.random.normal(kx, (N, C, H, W), jnp.float32)
    proto_local = jax.random.normal(kp, (N, P, C), jnp.float32)
    proto_global = jax.random.normal(kg, (P, C), jnp.float32)
    labels = jnp.array([[1, 0, 1, 0, 1, 0, 0, 1],
                        [0, 1, 1, 0, 0, 0, 1, 0]], dtype=jnp.int32)
    params = init_params(kparam, C)

    # --- local prototypes, f32 matmul inputs (tight correctness check) -----
    out_f32 = feature_aug_forward(x, proto_local, labels, params,
                                  is_global_prototype=False,
                                  compute_dtype=jnp.float32,
                                  out_dtype=jnp.float32)
    out_f32 = jax.block_until_ready(out_f32)
    ref = numpy_reference(x, proto_local, labels, params)
    np.testing.assert_allclose(np.asarray(out_f32), ref, atol=1e-2, rtol=1e-2)

    # --- local prototypes, bf16 matmuls + bf16 output (production config) --
    out_bf16 = feature_aug_forward(x, proto_local, labels, params,
                                   is_global_prototype=False,
                                   compute_dtype=jnp.bfloat16,
                                   out_dtype=jnp.bfloat16)
    out_bf16 = jax.block_until_ready(out_bf16)
    params_r = {k: _bf16_round(v) for k, v in params.items()}
    ref_bf = numpy_reference(_bf16_round(x), _bf16_round(proto_local),
                             labels, params_r)
    np.testing.assert_allclose(np.asarray(out_bf16.astype(jnp.float32)), ref_bf,
                               atol=8e-2, rtol=8e-2)

    # --- global prototype bank, bf16 ---------------------------------------
    out_g = feature_aug_forward(x, proto_global, labels, params,
                                is_global_prototype=True,
                                compute_dtype=jnp.bfloat16,
                                out_dtype=jnp.bfloat16)
    out_g = jax.block_until_ready(out_g)
    ref_g = numpy_reference(_bf16_round(x), _bf16_round(proto_global),
                            labels, params_r, is_global=True)
    np.testing.assert_allclose(np.asarray(out_g.astype(jnp.float32)), ref_g,
                               atol=8e-2, rtol=8e-2)

    print("KERNEL_OK")
</pallas_src>

<mosaic_0001>
module attributes {stable_mosaic.version = 11 : i64} {
  func.func @_feature_aug_kernel(%arg0: i32, %arg1: i32, %arg2: memref<1x64x128xf32, #tpu.memory_space<vmem>>, %arg3: memref<1x128x128xf32, #tpu.memory_space<vmem>>, %arg4: memref<1x256x128xf32, #tpu.memory_space<vmem>>, %arg5: memref<1x1x128xf32, #tpu.memory_space<vmem>>, %arg6: memref<128x128xf32, #tpu.memory_space<vmem>>, %arg7: memref<1x128xf32, #tpu.memory_space<vmem>>, %arg8: memref<1x128xf32, #tpu.memory_space<vmem>>, %arg9: memref<128x128xf32, #tpu.memory_space<vmem>>, %arg10: memref<1x128xf32, #tpu.memory_space<vmem>>, %arg11: memref<1x64x128xf32, #tpu.memory_space<vmem>>) attributes {dimension_semantics = [#tpu.dimension_semantics<parallel>, #tpu.dimension_semantics<parallel>], iteration_bounds = array<i64: 2, 1>, scalar_prefetch = 0 : i64, scratch_operands = 0 : i64, tpu.core_type = #tpu.core_type<tc>, window_params = [{transform_indices = @transform_0, window_bounds = array<i64: 1, 64, 128>}, {transform_indices = @transform_1, window_bounds = array<i64: 1, 128, 128>}, {transform_indices = @transform_2, window_bounds = array<i64: 1, 256, 128>}, {transform_indices = @transform_3, window_bounds = array<i64: 1, 1, 128>}, {pipeline_mode = #tpu.pipeline_mode<synchronous>, transform_indices = @transform_4, window_bounds = array<i64: 128, 128>}, {pipeline_mode = #tpu.pipeline_mode<synchronous>, transform_indices = @transform_5, window_bounds = array<i64: 1, 128>}, {pipeline_mode = #tpu.pipeline_mode<synchronous>, transform_indices = @transform_6, window_bounds = array<i64: 1, 128>}, {pipeline_mode = #tpu.pipeline_mode<synchronous>, transform_indices = @transform_7, window_bounds = array<i64: 128, 128>}, {pipeline_mode = #tpu.pipeline_mode<synchronous>, transform_indices = @transform_8, window_bounds = array<i64: 1, 128>}, {transform_indices = @transform_9, window_bounds = array<i64: 1, 64, 128>}]} {
    %c0 = arith.constant 0 : index
    %c0_0 = arith.constant 0 : index
    %c0_1 = arith.constant 0 : index
    %0 = vector.load %arg2[%c0, %c0_0, %c0_1] : memref<1x64x128xf32, #tpu.memory_space<vmem>>, vector<1x64x128xf32>
    %1 = vector.shape_cast %0 : vector<1x64x128xf32> to vector<64x128xf32>
    %c0_2 = arith.constant 0 : index
    %c0_3 = arith.constant 0 : index
    %2 = vector.load %arg6[%c0_2, %c0_3] : memref<128x128xf32, #tpu.memory_space<vmem>>, vector<128x128xf32>
    %cst = arith.constant dense<0.000000e+00> : vector<64x128xf32>
    %3 = tpu.matmul %1, %2, %cst {dimension_numbers = #tpu.dot_dimension_numbers<[1], [0], [0], [1], [0, 0, 1, 1], [], []>} : vector<64x128xf32>, vector<128x128xf32>, vector<64x128xf32> -> vector<64x128xf32>
    %c0_4 = arith.constant 0 : index
    %c0_5 = arith.constant 0 : index
    %4 = vector.load %arg7[%c0_4, %c0_5] : memref<1x128xf32, #tpu.memory_space<vmem>>, vector<1x128xf32>
    %5 = vector.broadcast %4 : vector<1x128xf32> to vector<64x128xf32>
    %6 = arith.addf %3, %5 : vector<64x128xf32>
    %c0_6 = arith.constant 0 : index
    %c0_7 = arith.constant 0 : index
    %c0_8 = arith.constant 0 : index
    %7 = vector.load %arg3[%c0_6, %c0_7, %c0_8] : memref<1x128x128xf32, #tpu.memory_space<vmem>>, vector<1x128x128xf32>
    %8 = vector.shape_cast %7 : vector<1x128x128xf32> to vector<128x128xf32>
    %cst_9 = arith.constant dense<0.000000e+00> : vector<64x128xf32>
    %9 = tpu.matmul %6, %8, %cst_9 {dimension_numbers = #tpu.dot_dimension_numbers<[1], [0], [0], [1], [0, 0, 1, 1], [], []>} : vector<64x128xf32>, vector<128x128xf32>, vector<64x128xf32> -> vector<64x128xf32>
    %c0_10 = arith.constant 0 : index
    %c0_11 = arith.constant 0 : index
    %c0_12 = arith.constant 0 : index
    %10 = vector.load %arg5[%c0_10, %c0_11, %c0_12] : memref<1x1x128xf32, #tpu.memory_space<vmem>>, vector<1x1x128xf32>
    %11 = vector.shape_cast %10 : vector<1x1x128xf32> to vector<1x128xf32>
    %12 = vector.broadcast %11 : vector<1x128xf32> to vector<64x128xf32>
    %13 = arith.addf %9, %12 : vector<64x128xf32>
    %cst_13 = arith.constant dense<0xFF800000> : vector<64xf32>
    %14 = vector.multi_reduction <maximumf>, %13, %cst_13 [1] : vector<64x128xf32> to vector<64xf32>
    %15 = vector.shape_cast %14 : vector<64xf32> to vector<64x1xf32>
    %16 = vector.broadcast %15 : vector<64x1xf32> to vector<64x128xf32>
    %17 = arith.subf %13, %16 : vector<64x128xf32>
    %18 = math.exp %17 : vector<64x128xf32>
    %cst_14 = arith.constant dense<0.000000e+00> : vector<64xf32>
    %19 = vector.multi_reduction <add>, %18, %cst_14 [1] : vector<64x128xf32> to vector<64xf32>
    %20 = vector.shape_cast %19 : vector<64xf32> to vector<64x1xf32>
    %21 = tpu.reciprocal %20 {approx = true} : vector<64x1xf32> -> vector<64x1xf32>
    %22 = vector.broadcast %21 : vector<64x1xf32> to vector<64x128xf32>
    %23 = arith.mulf %18, %22 : vector<64x128xf32>
    %24 = tpu.concatenate %23, %6 in 1 : vector<64x128xf32>, vector<64x128xf32> -> vector<64x256xf32>
    %c0_15 = arith.constant 0 : index
    %c0_16 = arith.constant 0 : index
    %c0_17 = arith.constant 0 : index
    %25 = vector.load %arg4[%c0_15, %c0_16, %c0_17] : memref<1x256x128xf32, #tpu.memory_space<vmem>>, vector<1x256x128xf32>
    %26 = vector.shape_cast %25 : vector<1x256x128xf32> to vector<256x128xf32>
    %cst_18 = arith.constant dense<0.000000e+00> : vector<64x128xf32>
    %27 = tpu.matmul %24, %26, %cst_18 {dimension_numbers = #tpu.dot_dimension_numbers<[1], [0], [0], [1], [0, 0, 1, 1], [], []>} : vector<64x256xf32>, vector<256x128xf32>, vector<64x128xf32> -> vector<64x128xf32>
    %c0_19 = arith.constant 0 : index
    %c0_20 = arith.constant 0 : index
    %28 = vector.load %arg8[%c0_19, %c0_20] : memref<1x128xf32, #tpu.memory_space<vmem>>, vector<1x128xf32>
    %29 = vector.broadcast %28 : vector<1x128xf32> to vector<64x128xf32>
    %30 = arith.addf %27, %29 : vector<64x128xf32>
    %cst_21 = arith.constant 0.000000e+00 : f32
    %31 = vector.broadcast %cst_21 : f32 to vector<64x128xf32>
    %32 = arith.maximumf %30, %31 : vector<64x128xf32>
    %c0_22 = arith.constant 0 : index
    %c0_23 = arith.constant 0 : index
    %33 = vector.load %arg9[%c0_22, %c0_23] : memref<128x128xf32, #tpu.memory_space<vmem>>, vector<128x128xf32>
    %cst_24 = arith.constant dense<0.000000e+00> : vector<64x128xf32>
    %34 = tpu.matmul %32, %33, %cst_24 {dimension_numbers = #tpu.dot_dimension_numbers<[1], [0], [0], [1], [0, 0, 1, 1], [], []>} : vector<64x128xf32>, vector<128x128xf32>, vector<64x128xf32> -> vector<64x128xf32>
    %35 = arith.addf %1, %34 : vector<64x128xf32>
    %c0_25 = arith.constant 0 : index
    %c0_26 = arith.constant 0 : index
    %36 = vector.load %arg10[%c0_25, %c0_26] : memref<1x128xf32, #tpu.memory_space<vmem>>, vector<1x128xf32>
    %37 = vector.broadcast %36 : vector<1x128xf32> to vector<64x128xf32>
    %38 = arith.addf %35, %37 : vector<64x128xf32>
    %cst_27 = arith.constant 0.000000e+00 : f32
    %39 = vector.broadcast %cst_27 : f32 to vector<64x128xf32>
    %40 = arith.maximumf %38, %39 : vector<64x128xf32>
    %c0_28 = arith.constant 0 : index
    %c0_29 = arith.constant 0 : index
    %c0_30 = arith.constant 0 : index
    %41 = vector.load %arg11[%c0_28, %c0_29, %c0_30] : memref<1x64x128xf32, #tpu.memory_space<vmem>>, vector<1x64x128xf32>
    %42 = vector.shape_cast %41 : vector<1x64x128xf32> to vector<64x128xf32>
    %43 = vector.shape_cast %40 : vector<64x128xf32> to vector<1x64x128xf32>
    tpu.vector_store %arg11[%c0_28, %c0_29, %c0_30], %43 {strides = array<i32>} : memref<1x64x128xf32, #tpu.memory_space<vmem>>, vector<1x64x128xf32>,
    return
  }
  func.func @transform_0(%arg0: i32, %arg1: i32) -> (i32, i32, i32) {
    %c0_i32 = arith.constant 0 : i32
    %c0_i32_0 = arith.constant 0 : i32
    return %arg0, %arg1, %c0_i32 : i32, i32, i32
  }
  func.func @transform_1(%arg0: i32, %arg1: i32) -> (i32, i32, i32) {
    %c0_i32 = arith.constant 0 : i32
    %c0_i32_0 = arith.constant 0 : i32
    %c0_i32_1 = arith.constant 0 : i32
    return %arg0, %c0_i32, %c0_i32_0 : i32, i32, i32
  }
  func.func @transform_2(%arg0: i32, %arg1: i32) -> (i32, i32, i32) {
    %c0_i32 = arith.constant 0 : i32
    %c0_i32_0 = arith.constant 0 : i32
    %c0_i32_1 = arith.constant 0 : i32
    return %arg0, %c0_i32, %c0_i32_0 : i32, i32, i32
  }
  func.func @transform_3(%arg0: i32, %arg1: i32) -> (i32, i32, i32) {
    %c0_i32 = arith.constant 0 : i32
    %c0_i32_0 = arith.constant 0 : i32
    %c0_i32_1 = arith.constant 0 : i32
    return %arg0, %c0_i32, %c0_i32_0 : i32, i32, i32
  }
  func.func @transform_4(%arg0: i32, %arg1: i32) -> (i32, i32) {
    %c0_i32 = arith.constant 0 : i32
    %c0_i32_0 = arith.constant 0 : i32
    %c0_i32_1 = arith.constant 0 : i32
    return %c0_i32, %c0_i32_0 : i32, i32
  }
  func.func @transform_5(%arg0: i32, %arg1: i32) -> (i32, i32) {
    %c0_i32 = arith.constant 0 : i32
    %c0_i32_0 = arith.constant 0 : i32
    %c0_i32_1 = arith.constant 0 : i32
    return %c0_i32, %c0_i32_0 : i32, i32
  }
  func.func @transform_6(%arg0: i32, %arg1: i32) -> (i32, i32) {
    %c0_i32 = arith.constant 0 : i32
    %c0_i32_0 = arith.constant 0 : i32
    %c0_i32_1 = arith.constant 0 : i32
    return %c0_i32, %c0_i32_0 : i32, i32
  }
  func.func @transform_7(%arg0: i32, %arg1: i32) -> (i32, i32) {
    %c0_i32 = arith.constant 0 : i32
    %c0_i32_0 = arith.constant 0 : i32
    %c0_i32_1 = arith.constant 0 : i32
    return %c0_i32, %c0_i32_0 : i32, i32
  }
  func.func @transform_8(%arg0: i32, %arg1: i32) -> (i32, i32) {
    %c0_i32 = arith.constant 0 : i32
    %c0_i32_0 = arith.constant 0 : i32
    %c0_i32_1 = arith.constant 0 : i32
    return %c0_i32, %c0_i32_0 : i32, i32
  }
  func.func @transform_9(%arg0: i32, %arg1: i32) -> (i32, i32, i32) {
    %c0_i32 = arith.constant 0 : i32
    %c0_i32_0 = arith.constant 0 : i32
    return %arg0, %arg1, %c0_i32 : i32, i32, i32
  }
}

module attributes {stable_mosaic.version = 11 : i64} {
  func.func @_feature_aug_kernel(%arg0: i32, %arg1: i32, %arg2: memref<1x64x128xf32, #tpu.memory_space<vmem>>, %arg3: memref<1x128x128xf32, #tpu.memory_space<vmem>>, %arg4: memref<1x256x128xf32, #tpu.memory_space<vmem>>, %arg5: memref<1x1x128xf32, #tpu.memory_space<vmem>>, %arg6: memref<128x128xf32, #tpu.memory_space<vmem>>, %arg7: memref<1x128xf32, #tpu.memory_space<vmem>>, %arg8: memref<1x128xf32, #tpu.memory_space<vmem>>, %arg9: memref<128x128xf32, #tpu.memory_space<vmem>>, %arg10: memref<1x128xf32, #tpu.memory_space<vmem>>, %arg11: memref<1x64x128xf32, #tpu.memory_space<vmem>>) attributes {dimension_semantics = [#tpu.dimension_semantics<parallel>, #tpu.dimension_semantics<parallel>], iteration_bounds = array<i64: 2, 1>, scalar_prefetch = 0 : i64, scratch_operands = 0 : i64, tpu.core_type = #tpu.core_type<tc>, window_params = [{transform_indices = @transform_0, window_bounds = array<i64: 1, 64, 128>}, {transform_indices = @transform_1, window_bounds = array<i64: 1, 128, 128>}, {transform_indices = @transform_2, window_bounds = array<i64: 1, 256, 128>}, {transform_indices = @transform_3, window_bounds = array<i64: 1, 1, 128>}, {pipeline_mode = #tpu.pipeline_mode<synchronous>, transform_indices = @transform_4, window_bounds = array<i64: 128, 128>}, {pipeline_mode = #tpu.pipeline_mode<synchronous>, transform_indices = @transform_5, window_bounds = array<i64: 1, 128>}, {pipeline_mode = #tpu.pipeline_mode<synchronous>, transform_indices = @transform_6, window_bounds = array<i64: 1, 128>}, {pipeline_mode = #tpu.pipeline_mode<synchronous>, transform_indices = @transform_7, window_bounds = array<i64: 128, 128>}, {pipeline_mode = #tpu.pipeline_mode<synchronous>, transform_indices = @transform_8, window_bounds = array<i64: 1, 128>}, {transform_indices = @transform_9, window_bounds = array<i64: 1, 64, 128>}]} {
    %c0 = arith.constant 0 : index
    %c0_0 = arith.constant 0 : index
    %c0_1 = arith.constant 0 : index
    %0 = vector.load %arg2[%c0, %c0_0, %c0_1] : memref<1x64x128xf32, #tpu.memory_space<vmem>>, vector<1x64x128xf32>
    %1 = vector.shape_cast %0 : vector<1x64x128xf32> to vector<64x128xf32>
    %c0_2 = arith.constant 0 : index
    %c0_3 = arith.constant 0 : index
    %2 = vector.load %arg6[%c0_2, %c0_3] : memref<128x128xf32, #tpu.memory_space<vmem>>, vector<128x128xf32>
    %cst = arith.constant dense<0.000000e+00> : vector<64x128xf32>
    %3 = tpu.matmul %1, %2, %cst {dimension_numbers = #tpu.dot_dimension_numbers<[1], [0], [0], [1], [0, 0, 1, 1], [], []>} : vector<64x128xf32>, vector<128x128xf32>, vector<64x128xf32> -> vector<64x128xf32>
    %c0_4 = arith.constant 0 : index
    %c0_5 = arith.constant 0 : index
    %4 = vector.load %arg7[%c0_4, %c0_5] : memref<1x128xf32, #tpu.memory_space<vmem>>, vector<1x128xf32>
    %5 = vector.broadcast %4 : vector<1x128xf32> to vector<64x128xf32>
    %6 = arith.addf %3, %5 : vector<64x128xf32>
    %c0_6 = arith.constant 0 : index
    %c0_7 = arith.constant 0 : index
    %c0_8 = arith.constant 0 : index
    %7 = vector.load %arg3[%c0_6, %c0_7, %c0_8] : memref<1x128x128xf32, #tpu.memory_space<vmem>>, vector<1x128x128xf32>
    %8 = vector.shape_cast %7 : vector<1x128x128xf32> to vector<128x128xf32>
    %cst_9 = arith.constant dense<0.000000e+00> : vector<64x128xf32>
    %9 = tpu.matmul %6, %8, %cst_9 {dimension_numbers = #tpu.dot_dimension_numbers<[1], [0], [0], [1], [0, 0, 1, 1], [], []>} : vector<64x128xf32>, vector<128x128xf32>, vector<64x128xf32> -> vector<64x128xf32>
    %c0_10 = arith.constant 0 : index
    %c0_11 = arith.constant 0 : index
    %c0_12 = arith.constant 0 : index
    %10 = vector.load %arg5[%c0_10, %c0_11, %c0_12] : memref<1x1x128xf32, #tpu.memory_space<vmem>>, vector<1x1x128xf32>
    %11 = vector.shape_cast %10 : vector<1x1x128xf32> to vector<1x128xf32>
    %12 = vector.broadcast %11 : vector<1x128xf32> to vector<64x128xf32>
    %13 = arith.addf %9, %12 : vector<64x128xf32>
    %cst_13 = arith.constant dense<0xFF800000> : vector<64xf32>
    %14 = vector.multi_reduction <maximumf>, %13, %cst_13 [1] : vector<64x128xf32> to vector<64xf32>
    %15 = vector.shape_cast %14 : vector<64xf32> to vector<64x1xf32>
    %16 = vector.broadcast %15 : vector<64x1xf32> to vector<64x128xf32>
    %17 = arith.subf %13, %16 : vector<64x128xf32>
    %18 = math.exp %17 : vector<64x128xf32>
    %cst_14 = arith.constant dense<0.000000e+00> : vector<64xf32>
    %19 = vector.multi_reduction <add>, %18, %cst_14 [1] : vector<64x128xf32> to vector<64xf32>
    %20 = vector.shape_cast %19 : vector<64xf32> to vector<64x1xf32>
    %21 = tpu.reciprocal %20 {approx = true} : vector<64x1xf32> -> vector<64x1xf32>
    %22 = vector.broadcast %21 : vector<64x1xf32> to vector<64x128xf32>
    %23 = arith.mulf %18, %22 : vector<64x128xf32>
    %24 = tpu.concatenate %23, %6 in 1 : vector<64x128xf32>, vector<64x128xf32> -> vector<64x256xf32>
    %c0_15 = arith.constant 0 : index
    %c0_16 = arith.constant 0 : index
    %c0_17 = arith.constant 0 : index
    %25 = vector.load %arg4[%c0_15, %c0_16, %c0_17] : memref<1x256x128xf32, #tpu.memory_space<vmem>>, vector<1x256x128xf32>
    %26 = vector.shape_cast %25 : vector<1x256x128xf32> to vector<256x128xf32>
    %cst_18 = arith.constant dense<0.000000e+00> : vector<64x128xf32>
    %27 = tpu.matmul %24, %26, %cst_18 {dimension_numbers = #tpu.dot_dimension_numbers<[1], [0], [0], [1], [0, 0, 1, 1], [], []>} : vector<64x256xf32>, vector<256x128xf32>, vector<64x128xf32> -> vector<64x128xf32>
    %c0_19 = arith.constant 0 : index
    %c0_20 = arith.constant 0 : index
    %28 = vector.load %arg8[%c0_19, %c0_20] : memref<1x128xf32, #tpu.memory_space<vmem>>, vector<1x128xf32>
    %29 = vector.broadcast %28 : vector<1x128xf32> to vector<64x128xf32>
    %30 = arith.addf %27, %29 : vector<64x128xf32>
    %cst_21 = arith.constant 0.000000e+00 : f32
    %31 = vector.broadcast %cst_21 : f32 to vector<64x128xf32>
    %32 = arith.maximumf %30, %31 : vector<64x128xf32>
    %c0_22 = arith.constant 0 : index
    %c0_23 = arith.constant 0 : index
    %33 = vector.load %arg9[%c0_22, %c0_23] : memref<128x128xf32, #tpu.memory_space<vmem>>, vector<128x128xf32>
    %cst_24 = arith.constant dense<0.000000e+00> : vector<64x128xf32>
    %34 = tpu.matmul %32, %33, %cst_24 {dimension_numbers = #tpu.dot_dimension_numbers<[1], [0], [0], [1], [0, 0, 1, 1], [], []>} : vector<64x128xf32>, vector<128x128xf32>, vector<64x128xf32> -> vector<64x128xf32>
    %35 = arith.addf %1, %34 : vector<64x128xf32>
    %c0_25 = arith.constant 0 : index
    %c0_26 = arith.constant 0 : index
    %36 = vector.load %arg10[%c0_25, %c0_26] : memref<1x128xf32, #tpu.memory_space<vmem>>, vector<1x128xf32>
    %37 = vector.broadcast %36 : vector<1x128xf32> to vector<64x128xf32>
    %38 = arith.addf %35, %37 : vector<64x128xf32>
    %cst_27 = arith.constant 0.000000e+00 : f32
    %39 = vector.broadcast %cst_27 : f32 to vector<64x128xf32>
    %40 = arith.maximumf %38, %39 : vector<64x128xf32>
    %c0_28 = arith.constant 0 : index
    %c0_29 = arith.constant 0 : index
    %c0_30 = arith.constant 0 : index
    %41 = vector.load %arg11[%c0_28, %c0_29, %c0_30] : memref<1x64x128xf32, #tpu.memory_space<vmem>>, vector<1x64x128xf32>
    %42 = vector.shape_cast %41 : vector<1x64x128xf32> to vector<64x128xf32>
    %43 = vector.shape_cast %40 : vector<64x128xf32> to vector<1x64x128xf32>
    tpu.vector_store %arg11[%c0_28, %c0_29, %c0_30], %43 {strides = array<i32>} : memref<1x64x128xf32, #tpu.memory_space<vmem>>, vector<1x64x128xf32>,
    return
  }
  func.func @transform_0(%arg0: i32, %arg1: i32) -> (i32, i32, i32) {
    %c0_i32 = arith.constant 0 : i32
    %c0_i32_0 = arith.constant 0 : i32
    return %arg0, %arg1, %c0_i32 : i32, i32, i32
  }
  func.func @transform_1(%arg0: i32, %arg1: i32) -> (i32, i32, i32) {
    %c0_i32 = arith.constant 0 : i32
    %c0_i32_0 = arith.constant 0 : i32
    %c0_i32_1 = arith.constant 0 : i32
    return %arg0, %c0_i32, %c0_i32_0 : i32, i32, i32
  }
  func.func @transform_2(%arg0: i32, %arg1: i32) -> (i32, i32, i32) {
    %c0_i32 = arith.constant 0 : i32
    %c0_i32_0 = arith.constant 0 : i32
    %c0_i32_1 = arith.constant 0 : i32
    return %arg0, %c0_i32, %c0_i32_0 : i32, i32, i32
  }
  func.func @transform_3(%arg0: i32, %arg1: i32) -> (i32, i32, i32) {
    %c0_i32 = arith.constant 0 : i32
    %c0_i32_0 = arith.constant 0 : i32
    %c0_i32_1 = arith.constant 0 : i32
    return %arg0, %c0_i32, %c0_i32_0 : i32, i32, i32
  }
  func.func @transform_4(%arg0: i32, %arg1: i32) -> (i32, i32) {
    %c0_i32 = arith.constant 0 : i32
    %c0_i32_0 = arith.constant 0 : i32
    %c0_i32_1 = arith.constant 0 : i32
    return %c0_i32, %c0_i32_0 : i32, i32
  }
  func.func @transform_5(%arg0: i32, %arg1: i32) -> (i32, i32) {
    %c0_i32 = arith.constant 0 : i32
    %c0_i32_0 = arith.constant 0 : i32
    %c0_i32_1 = arith.constant 0 : i32
    return %c0_i32, %c0_i32_0 : i32, i32
  }
  func.func @transform_6(%arg0: i32, %arg1: i32) -> (i32, i32) {
    %c0_i32 = arith.constant 0 : i32
    %c0_i32_0 = arith.constant 0 : i32
    %c0_i32_1 = arith.constant 0 : i32
    return %c0_i32, %c0_i32_0 : i32, i32
  }
  func.func @transform_7(%arg0: i32, %arg1: i32) -> (i32, i32) {
    %c0_i32 = arith.constant 0 : i32
    %c0_i32_0 = arith.constant 0 : i32
    %c0_i32_1 = arith.constant 0 : i32
    return %c0_i32, %c0_i32_0 : i32, i32
  }
  func.func @transform_8(%arg0: i32, %arg1: i32) -> (i32, i32) {
    %c0_i32 = arith.constant 0 : i32
    %c0_i32_0 = arith.constant 0 : i32
    %c0_i32_1 = arith.constant 0 : i32
    return %c0_i32, %c0_i32_0 : i32, i32
  }
  func.func @transform_9(%arg0: i32, %arg1: i32) -> (i32, i32, i32) {
    %c0_i32 = arith.constant 0 : i32
    %c0_i32_0 = arith.constant 0 : i32
    return %arg0, %arg1, %c0_i32 : i32, i32, i32
  }
}

</mosaic_0001>

<llo_original>
// kernel: tpu_custom_call.1
$region0: #{tpu_custom_call.1}
  #allocation0 [shape = 'u32[]', space=smem, size = 0x4, offset = 0x4, fixed_abs, tag = 'smem constant byte address 0x4 - core index']
  #allocation1 [shape = 'u32[144,128]{1,0:T(1,128)}', space=vmem, size = 0x12000, scoped, tag = 'internal scratch']
  %s0 = inlined_call_operand.hbm [shape: f32[2,64,128], index: 0, kind: input, shape index: {}]
  %s1 = inlined_call_operand.hbm [shape: f32[2,128,128], index: 1, kind: input, shape index: {}]
  %s2 = inlined_call_operand.hbm [shape: f32[2,256,128], index: 2, kind: input, shape index: {}]
  %s3 = inlined_call_operand.vmem [shape: f32[2,1,128], index: 3, kind: input, shape index: {}]
  %s4 = inlined_call_operand.hbm [shape: f32[128,128], index: 4, kind: input, shape index: {}]
  %s5 = inlined_call_operand.vmem [shape: f32[1,128], index: 5, kind: input, shape index: {}]
  %s6 = inlined_call_operand.vmem [shape: f32[1,128], index: 6, kind: input, shape index: {}]
  %s7 = inlined_call_operand.hbm [shape: f32[128,128], index: 7, kind: input, shape index: {}]
  %s8 = inlined_call_operand.vmem [shape: f32[1,128], index: 8, kind: input, shape index: {}]
  %s9 = inlined_call_operand.hbm [shape: f32[2,64,128], index: 9, kind: output, shape index: {}]
  %s10 = sld [smem:[#allocation0]]
  $region89: #{tpu_custom_call.1} parent=0
    _
  %s12 = ssub.s32 1, %s10
  %s13 = scalar_select 0, %s12, %s10
  $region1: #{tpu_custom_call.1} parent=0
    #allocation2 [shape = 'u8[65536]{0}', space=vmem, size = 0x10000, scoped, tag = 'input window, operand 0']
    #allocation3 [shape = 's32[2]{0}', space=sflag, size = 0x8, scoped, tag = 'scoped memory for tpu_custom_call.1']
    #allocation4 [shape = 's32[2]{0}', space=sflag, size = 0x8, scoped, tag = 'scoped memory for tpu_custom_call.1']
    #allocation5 [shape = 'u8[131072]{0}', space=vmem, size = 0x20000, scoped, tag = 'input window, operand 1']
    #allocation6 [shape = 's32[2]{0}', space=sflag, size = 0x8, scoped, tag = 'scoped memory for tpu_custom_call.1']
    #allocation7 [shape = 'u8[262144]{0}', space=vmem, size = 0x40000, scoped, tag = 'input window, operand 2']
    #allocation8 [shape = 'u8[65536]{0}', space=vmem, size = 0x10000, scoped, tag = 'input window, operand 4, single buffered']
    #allocation9 [shape = 's32[1]{0}', space=sflag, size = 0x4, scoped, tag = 'scoped memory for tpu_custom_call.1']
    #allocation10 [shape = 'u8[65536]{0}', space=vmem, size = 0x10000, scoped, tag = 'input window, operand 7, single buffered']
    #allocation11 [shape = 'u8[65536]{0}', space=vmem, size = 0x10000, scoped, tag = 'output window, operand 0']
    %14 = vsyncpa [#allocation3], 0
    %s15 = scalar_lea.sflag [#allocation3], 1
    %16 = vsyncpa %s15, 0
    %17 = vsyncpa [#allocation6], 0
    %s18 = scalar_lea.sflag [#allocation6], 1
    %19 = vsyncpa %s18, 0
    %20 = vsyncpa [#allocation9], 0
    %21 = vsyncpa [#allocation4], 0
    %s22 = scalar_lea.sflag [#allocation4], 1
    %23 = vsyncpa %s22, 0
    loop: start=0, step=1, limit=4
    $region2: #{tpu_custom_call.1} parent=1 // loop_pre_header
      _
    $region3: #{tpu_custom_call.1} parent=1 // loop_header
      %s25 = sphi 0, %s29
      %p26 = scmp.ge.s32.totalorder %s25, 4
      %s32 = sphi 0, %s44
      %s33 = sphi 0, %s40
      %s34 = sphi 0, %s32
      %s35 = sphi 0, %s33
      %s36 = sphi 0, %s34
      %s37 = sphi 0, %s35
      %s49 = sphi 0, %s51
      %s52 = sphi 0, %s49
      %s53 = sphi 0, %s52
      %s69 = sphi 0, %s53
      %s75 = sphi 0, %s77
      %s78 = sphi 0, %s75
      %s79 = sphi 0, %s78
      %s95 = sphi 0, %s79
      %s101 = sphi 0, %s103
      %s104 = sphi 0, %s101
      %s105 = sphi 0, %s104
      %s121 = sphi 0, %s105
      %s127 = sphi 0, %s129
      %s130 = sphi 0, %s127
      %s131 = sphi 0, %s130
      %s147 = sphi 0, %s131
      %s151 = sphi 0, %s151
      %s153 = sphi 0, %s151
      %s154 = sphi 0, %s153
      %s168 = sphi 0, %s154
      %s172 = sphi 0, %s172
      %s174 = sphi 0, %s172
      %s175 = sphi 0, %s174
      %s189 = sphi 0, %s175
      %s193 = sphi 0, %s193
      %s195 = sphi 0, %s193
      %s196 = sphi 0, %s195
      %s210 = sphi 0, %s196
      %s214 = sphi 0, %s214
      %s216 = sphi 0, %s214
      %s217 = sphi 0, %s216
      %s231 = sphi 0, %s217
      %s235 = sphi 0, %s235
      %s237 = sphi 0, %s235
      %s238 = sphi 0, %s237
      %s252 = sphi 0, %s238
      %s260 = sphi 0, %s262
      %s263 = sphi 0, %s260
      %s264 = sphi 0, %s263
      %s280 = sphi 0, %s264
    $region4: #{tpu_custom_call.1} parent=1 // loop_header_branch
      %28 = sbr.rel (%p26) target = $region8
    $region5: #{tpu_custom_call.1} parent=1 // loop_body
      %s30 = ssub.s32 %s25, 1
      %s31 = ssub.s32 %s25, 2
      %s38 = sadd.s32 1, %s33
      %p39 = scmp.ge.s32.totalorder %s38, 1
      %s40 = scalar_select %p39, 0, %s38
      %s41 = sadd.s32 1, %s32
      %s42 = scalar_select %p39, %s41, %s32
      %p43 = scmp.ge.s32.totalorder %s42, 2
      %s44 = scalar_select %p43, 0, %s42
      %s45 = ssub.s32 %s32, %s44
      %s46 = ssub.s32 %s33, %s40
      %s47 = sor.u32 %s45, %s46
      %p48 = scmp.eq.s32.totalorder %s47, 0
      %s50 = sadd.s32 %s49, 1
      %s51 = scalar_select %p48, %s49, %s50
      %p54 = pneg %p48
      %p55 = scmp.eq.s32.totalorder %s25, 1
      %p56 = por %p54, %p55
      %p57 = scmp.ne.s32.totalorder %s49, %s52
      %p58 = scmp.eq.s32.totalorder %s25, 0
      %p59 = por %p57, %p58
      %p60 = scmp.ne.s32.totalorder %s49, %s52
      %p61 = scmp.eq.s32.totalorder %s30, 1
      %p62 = por %p60, %p61
      %p63 = scmp.ne.s32.totalorder %s52, %s53
      %p64 = scmp.eq.s32.totalorder %s30, 0
      %p65 = por %p63, %p64
      %p66 = scmp.ne.s32.totalorder %s52, %s53
      %p67 = scmp.eq.s32.totalorder %s31, 1
      %p68 = por %p66, %p67
      %p70 = scmp.ne.s32.totalorder %s53, %s69
      %p71 = scmp.eq.s32.totalorder %s31, 0
      %p72 = por %p70, %p71
      %s73 = ssub.s32 %s32, %s44
      %p74 = scmp.eq.s32.totalorder %s73, 0
      %s76 = sadd.s32 %s75, 1
      %s77 = scalar_select %p74, %s75, %s76
      %p80 = pneg %p74
      %p81 = scmp.eq.s32.totalorder %s25, 1
      %p82 = por %p80, %p81
      %p83 = scmp.ne.s32.totalorder %s75, %s78
      %p84 = scmp.eq.s32.totalorder %s25, 0
      %p85 = por %p83, %p84
      %p86 = scmp.ne.s32.totalorder %s75, %s78
      %p87 = scmp.eq.s32.totalorder %s30, 1
      %p88 = por %p86, %p87
      %p89 = scmp.ne.s32.totalorder %s78, %s79
      %p90 = scmp.eq.s32.totalorder %s30, 0
      %p91 = por %p89, %p90
      %p92 = scmp.ne.s32.totalorder %s78, %s79
      %p93 = scmp.eq.s32.totalorder %s31, 1
      %p94 = por %p92, %p93
      %p96 = scmp.ne.s32.totalorder %s79, %s95
      %p97 = scmp.eq.s32.totalorder %s31, 0
      %p98 = por %p96, %p97
      %s99 = ssub.s32 %s32, %s44
      %p100 = scmp.eq.s32.totalorder %s99, 0
      %s102 = sadd.s32 %s101, 1
      %s103 = scalar_select %p100, %s101, %s102
      %p106 = pneg %p100
      %p107 = scmp.eq.s32.totalorder %s25, 1
      %p108 = por %p106, %p107
      %p109 = scmp.ne.s32.totalorder %s101, %s104
      %p110 = scmp.eq.s32.totalorder %s25, 0
      %p111 = por %p109, %p110
      %p112 = scmp.ne.s32.totalorder %s101, %s104
      %p113 = scmp.eq.s32.totalorder %s30, 1
      %p114 = por %p112, %p113
      %p115 = scmp.ne.s32.totalorder %s104, %s105
      %p116 = scmp.eq.s32.totalorder %s30, 0
      %p117 = por %p115, %p116
      %p118 = scmp.ne.s32.totalorder %s104, %s105
      %p119 = scmp.eq.s32.totalorder %s31, 1
      %p120 = por %p118, %p119
      %p122 = scmp.ne.s32.totalorder %s105, %s121
      %p123 = scmp.eq.s32.totalorder %s31, 0
      %p124 = por %p122, %p123
      %s125 = ssub.s32 %s32, %s44
      %p126 = scmp.eq.s32.totalorder %s125, 0
      %s128 = sadd.s32 %s127, 1
      %s129 = scalar_select %p126, %s127, %s128
      %p132 = pneg %p126
      %p133 = scmp.eq.s32.totalorder %s25, 1
      %p134 = por %p132, %p133
      %p135 = scmp.ne.s32.totalorder %s127, %s130
      %p136 = scmp.eq.s32.totalorder %s25, 0
      %p137 = por %p135, %p136
      %p138 = scmp.ne.s32.totalorder %s127, %s130
      %p139 = scmp.eq.s32.totalorder %s30, 1
      %p140 = por %p138, %p139
      %p141 = scmp.ne.s32.totalorder %s130, %s131
      %p142 = scmp.eq.s32.totalorder %s30, 0
      %p143 = por %p141, %p142
      %p144 = scmp.ne.s32.totalorder %s130, %s131
      %p145 = scmp.eq.s32.totalorder %s31, 1
      %p146 = por %p144, %p145
      %p148 = scmp.ne.s32.totalorder %s131, %s147
      %p149 = scmp.eq.s32.totalorder %s31, 0
      %p150 = por %p148, %p149
      %s152 = sadd.s32 %s151, 1
      %p155 = scmp.eq.s32.totalorder %s25, 1
      %p156 = scmp.ne.s32.totalorder %s151, %s153
      %p157 = scmp.eq.s32.totalorder %s25, 0
      %p158 = por %p156, %p157
      %p159 = scmp.ne.s32.totalorder %s151, %s153
      %p160 = scmp.eq.s32.totalorder %s30, 1
      %p161 = por %p159, %p160
      %p162 = scmp.ne.s32.totalorder %s153, %s154
      %p163 = scmp.eq.s32.totalorder %s30, 0
      %p164 = por %p162, %p163
      %p165 = scmp.ne.s32.totalorder %s153, %s154
      %p166 = scmp.eq.s32.totalorder %s31, 1
      %p167 = por %p165, %p166
      %p169 = scmp.ne.s32.totalorder %s154, %s168
      %p170 = scmp.eq.s32.totalorder %s31, 0
      %p171 = por %p169, %p170
      %s173 = sadd.s32 %s172, 1
      %p176 = scmp.eq.s32.totalorder %s25, 1
      %p177 = scmp.ne.s32.totalorder %s172, %s174
      %p178 = scmp.eq.s32.totalorder %s25, 0
      %p179 = por %p177, %p178
      %p180 = scmp.ne.s32.totalorder %s172, %s174
      %p181 = scmp.eq.s32.totalorder %s30, 1
      %p182 = por %p180, %p181
      %p183 = scmp.ne.s32.totalorder %s174, %s175
      %p184 = scmp.eq.s32.totalorder %s30, 0
      %p185 = por %p183, %p184
      %p186 = scmp.ne.s32.totalorder %s174, %s175
      %p187 = scmp.eq.s32.totalorder %s31, 1
      %p188 = por %p186, %p187
      %p190 = scmp.ne.s32.totalorder %s175, %s189
      %p191 = scmp.eq.s32.totalorder %s31, 0
      %p192 = por %p190, %p191
      %s194 = sadd.s32 %s193, 1
      %p197 = scmp.eq.s32.totalorder %s25, 1
      %p198 = scmp.ne.s32.totalorder %s193, %s195
      %p199 = scmp.eq.s32.totalorder %s25, 0
      %p200 = por %p198, %p199
      %p201 = scmp.ne.s32.totalorder %s193, %s195
      %p202 = scmp.eq.s32.totalorder %s30, 1
      %p203 = por %p201, %p202
      %p204 = scmp.ne.s32.totalorder %s195, %s196
      %p205 = scmp.eq.s32.totalorder %s30, 0
      %p206 = por %p204, %p205
      %p207 = scmp.ne.s32.totalorder %s195, %s196
      %p208 = scmp.eq.s32.totalorder %s31, 1
      %p209 = por %p207, %p208
      %p211 = scmp.ne.s32.totalorder %s196, %s210
      %p212 = scmp.eq.s32.totalorder %s31, 0
      %p213 = por %p211, %p212
      %s215 = sadd.s32 %s214, 1
      %p218 = scmp.eq.s32.totalorder %s25, 1
      %p219 = scmp.ne.s32.totalorder %s214, %s216
      %p220 = scmp.eq.s32.totalorder %s25, 0
      %p221 = por %p219, %p220
      %p222 = scmp.ne.s32.totalorder %s214, %s216
      %p223 = scmp.eq.s32.totalorder %s30, 1
      %p224 = por %p222, %p223
      %p225 = scmp.ne.s32.totalorder %s216, %s217
      %p226 = scmp.eq.s32.totalorder %s30, 0
      %p227 = por %p225, %p226
      %p228 = scmp.ne.s32.totalorder %s216, %s217
      %p229 = scmp.eq.s32.totalorder %s31, 1
      %p230 = por %p228, %p229
      %p232 = scmp.ne.s32.totalorder %s217, %s231
      %p233 = scmp.eq.s32.totalorder %s31, 0
      %p234 = por %p232, %p233
      %s236 = sadd.s32 %s235, 1
      %p239 = scmp.eq.s32.totalorder %s25, 1
      %p240 = scmp.ne.s32.totalorder %s235, %s237
      %p241 = scmp.eq.s32.totalorder %s25, 0
      %p242 = por %p240, %p241
      %p243 = scmp.ne.s32.totalorder %s235, %s237
      %p244 = scmp.eq.s32.totalorder %s30, 1
      %p245 = por %p243, %p244
      %p246 = scmp.ne.s32.totalorder %s237, %s238
      %p247 = scmp.eq.s32.totalorder %s30, 0
      %p248 = por %p246, %p247
      %p249 = scmp.ne.s32.totalorder %s237, %s238
      %p250 = scmp.eq.s32.totalorder %s31, 1
      %p251 = por %p249, %p250
      %p253 = scmp.ne.s32.totalorder %s238, %s252
      %p254 = scmp.eq.s32.totalorder %s31, 0
      %p255 = por %p253, %p254
      %s256 = ssub.s32 %s32, %s44
      %s257 = ssub.s32 %s33, %s40
      %s258 = sor.u32 %s256, %s257
      %p259 = scmp.eq.s32.totalorder %s258, 0
      %s261 = sadd.s32 %s260, 1
      %s262 = scalar_select %p259, %s260, %s261
      %p265 = pneg %p259
      %p266 = scmp.eq.s32.totalorder %s25, 1
      %p267 = por %p265, %p266
      %p268 = scmp.ne.s32.totalorder %s260, %s263
      %p269 = scmp.eq.s32.totalorder %s25, 0
      %p270 = por %p268, %p269
      %p271 = scmp.ne.s32.totalorder %s260, %s263
      %p272 = scmp.eq.s32.totalorder %s30, 1
      %p273 = por %p271, %p272
      %p274 = scmp.ne.s32.totalorder %s263, %s264
      %p275 = scmp.eq.s32.totalorder %s30, 0
      %p276 = por %p274, %p275
      %p277 = scmp.ne.s32.totalorder %s263, %s264
      %p278 = scmp.eq.s32.totalorder %s31, 1
      %p279 = por %p277, %p278
      %p281 = scmp.ne.s32.totalorder %s264, %s280
      %p282 = scmp.eq.s32.totalorder %s31, 0
      %p283 = por %p281, %p282
      %p284 = scmp.le.s32.totalorder 1, %s25
      %p285 = scmp.lt.s32.totalorder %s25, 3
      %p286 = pnand %p284, %p285
      %p287 = pneg %p286
      // Predicated region
      $region9: #{tpu_custom_call.1} parent=5 // pred_check
        _
      $region10: #{tpu_custom_call.1} parent=5 // pred_check_branch
        %289 = sbr.rel (%p286) target = $region12
      $region11: #{tpu_custom_call.1} parent=5 // pred_region
        %s290 = ssub.s32 %s25, 1
        // Predicated region
        $region13: #{tpu_custom_call.1} parent=11 // pred_check
          %p291 = pneg %p164
        $region14: #{tpu_custom_call.1} parent=11 // pred_check_branch
          %293 = sbr.rel (%p291) target = $region16
        $region15: #{tpu_custom_call.1} parent=11 // pred_region
          %s295 = ssub.s32 2048, 2048
          %296 = vsyncadd [#allocation9], %s295
          %s297 = sshll.u32 [#allocation8], 4
          %s298 = int_to_ptr.vmem [resolvable:$true] %s297
          %303 = dma.hbm_to_vmem [thread:$0]  %s4, 2048, %s298, [#allocation9], 128, 128, 8
        $region16: #{tpu_custom_call.1} parent=11 // pred_fallthru
          _
        // Predicated region
        $region17: #{tpu_custom_call.1} parent=11 // pred_check
          %p304 = pneg %p185
        $region18: #{tpu_custom_call.1} parent=11 // pred_check_branch
          %306 = sbr.rel (%p304) target = $region20
        $region19: #{tpu_custom_call.1} parent=11 // pred_region
          _
        $region20: #{tpu_custom_call.1} parent=11 // pred_fallthru
          _
        // Predicated region
        $region21: #{tpu_custom_call.1} parent=11 // pred_check
          %p307 = pneg %p206
        $region22: #{tpu_custom_call.1} parent=11 // pred_check_branch
          %309 = sbr.rel (%p307) target = $region24
        $region23: #{tpu_custom_call.1} parent=11 // pred_region
          _
        $region24: #{tpu_custom_call.1} parent=11 // pred_fallthru
          _
        // Predicated region
        $region25: #{tpu_custom_call.1} parent=11 // pred_check
          %p310 = pneg %p227
        $region26: #{tpu_custom_call.1} parent=11 // pred_check_branch
          %312 = sbr.rel (%p310) target = $region28
        $region27: #{tpu_custom_call.1} parent=11 // pred_region
          %s314 = ssub.s32 2048, 2048
          %315 = vsyncadd [#allocation9], %s314
          %s316 = sshll.u32 [#allocation10], 4
          %s317 = int_to_ptr.vmem [resolvable:$true] %s316
          %322 = dma.hbm_to_vmem [thread:$0]  %s7, 2048, %s317, [#allocation9], 128, 128, 8
        $region28: #{tpu_custom_call.1} parent=11 // pred_fallthru
          _
        // Predicated region
        $region29: #{tpu_custom_call.1} parent=11 // pred_check
          %p323 = pneg %p248
        $region30: #{tpu_custom_call.1} parent=11 // pred_check_branch
          %325 = sbr.rel (%p323) target = $region32
        $region31: #{tpu_custom_call.1} parent=11 // pred_region
          _
        $region32: #{tpu_custom_call.1} parent=11 // pred_fallthru
          _
      $region12: #{tpu_custom_call.1} parent=5 // pred_fallthru
        _
      %p326 = scmp.lt.s32.totalorder %s25, 2
      // Predicated region
      $region33: #{tpu_custom_call.1} parent=5 // pred_check
        %p327 = pneg %p326
      $region34: #{tpu_custom_call.1} parent=5 // pred_check_branch
        %329 = sbr.rel (%p327) target = $region36
      $region35: #{tpu_custom_call.1} parent=5 // pred_region
        // Predicated region
        $region37: #{tpu_custom_call.1} parent=35 // pred_check
          %p330 = pneg %p59
        $region38: #{tpu_custom_call.1} parent=35 // pred_check_branch
          %332 = sbr.rel (%p330) target = $region40
        $region39: #{tpu_custom_call.1} parent=35 // pred_region
          %s333 = sand.u32 %s49, 1
          %s334 = scalar_lea.sflag [#allocation3], %s333
          %s335 = sand.u32 %s49, 1
          %s336 = smul.addr %s335, 64
          %s337 = scalar_lea.vmem [#allocation2], %s336
          %s338 = smul.u32 8, %s33
          %s340 = ssub.s32 1024, 1024
          %341 = vsyncadd %s334, %s340
          %s342 = smul.addr %s32, 8
          %s343 = sadd.s32 %s338, %s342
          %s344 = smul.addr %s343, 128
          %s345 = scalar_lea.hbm %s0, %s344
          %s346 = sshll.u32 %s337, 4
          %s347 = int_to_ptr.vmem [resolvable:$true] %s346
          %352 = dma.hbm_to_vmem [thread:$0]  %s345, 1024, %s347, %s334, 128, 128, 8
        $region40: #{tpu_custom_call.1} parent=35 // pred_fallthru
          _
        // Predicated region
        $region41: #{tpu_custom_call.1} parent=35 // pred_check
          %p353 = pneg %p85
        $region42: #{tpu_custom_call.1} parent=35 // pred_check_branch
          %355 = sbr.rel (%p353) target = $region44
        $region43: #{tpu_custom_call.1} parent=35 // pred_region
          %s356 = sand.u32 %s25, 1
          %s357 = scalar_lea.sflag [#allocation6], %s356
          %s358 = sand.u32 %s75, 1
          %s359 = smul.addr %s358, 128
          %s360 = scalar_lea.vmem [#allocation5], %s359
          %s362 = ssub.s32 2048, 2048
          %363 = vsyncadd %s357, %s362
          %s364 = smul.addr %s32, 16
          %s365 = smul.addr %s364, 128
          %s366 = scalar_lea.hbm %s1, %s365
          %s367 = sshll.u32 %s360, 4
          %s368 = int_to_ptr.vmem [resolvable:$true] %s367
          %373 = dma.hbm_to_vmem [thread:$0]  %s366, 2048, %s368, %s357, 128, 128, 8
        $region44: #{tpu_custom_call.1} parent=35 // pred_fallthru
          _
        // Predicated region
        $region45: #{tpu_custom_call.1} parent=35 // pred_check
          %p374 = pneg %p111
        $region46: #{tpu_custom_call.1} parent=35 // pred_check_branch
          %376 = sbr.rel (%p374) target = $region48
        $region47: #{tpu_custom_call.1} parent=35 // pred_region
          %s377 = sand.u32 %s25, 1
          %s378 = scalar_lea.sflag [#allocation6], %s377
          %s379 = sand.u32 %s101, 1
          %s380 = smul.addr %s379, 256
          %s381 = scalar_lea.vmem [#allocation7], %s380
          %s383 = ssub.s32 4096, 4096
          %384 = vsyncadd %s378, %s383
          %s385 = smul.addr %s32, 32
          %s386 = smul.addr %s385, 128
          %s387 = scalar_lea.hbm %s2, %s386
          %s388 = sshll.u32 %s381, 4
          %s389 = int_to_ptr.vmem [resolvable:$true] %s388
          %394 = dma.hbm_to_vmem [thread:$0]  %s387, 4096, %s389, %s378, 128, 128, 8
        $region48: #{tpu_custom_call.1} parent=35 // pred_fallthru
          _
        // Predicated region
        $region49: #{tpu_custom_call.1} parent=35 // pred_check
          %p395 = pneg %p137
        $region50: #{tpu_custom_call.1} parent=35 // pred_check_branch
          %397 = sbr.rel (%p395) target = $region52
        $region51: #{tpu_custom_call.1} parent=35 // pred_region
          %p398 = scmp.lt.s32.totalorder %s32, 1
          %s399 = scalar_select %p398, %s32, 1
          %s400 = scalar_lea.vmem %s3, %s399
        $region52: #{tpu_custom_call.1} parent=35 // pred_fallthru
          _
      $region36: #{tpu_custom_call.1} parent=5 // pred_fallthru
        _
      %p401 = scmp.le.s32.totalorder 1, %s25
      %p402 = scmp.lt.s32.totalorder %s25, 3
      %p403 = pnand %p401, %p402
      %p404 = pneg %p403
      // Predicated region
      $region53: #{tpu_custom_call.1} parent=5 // pred_check
        _
      $region54: #{tpu_custom_call.1} parent=5 // pred_check_branch
        %406 = sbr.rel (%p403) target = $region56
      $region55: #{tpu_custom_call.1} parent=5 // pred_region
        %s407 = ssub.s32 %s25, 1
        %s408 = sand.u32 %s52, 1
        %s409 = scalar_lea.sflag [#allocation3], %s408
        %s410 = sand.u32 %s52, 1
        %s411 = smul.addr %s410, 64
        %s412 = scalar_lea.vmem [#allocation2], %s411
        // Predicated region
        $region57: #{tpu_custom_call.1} parent=55 // pred_check
          %p413 = pneg %p65
        $region58: #{tpu_custom_call.1} parent=55 // pred_check_branch
          %415 = sbr.rel (%p413) target = $region60
        $region59: #{tpu_custom_call.1} parent=55 // pred_region
          %416 = dma.done %s409, 1024
        $region60: #{tpu_custom_call.1} parent=55 // pred_fallthru
          _
        %s417 = sand.u32 %s30, 1
        %s418 = scalar_lea.sflag [#allocation6], %s417
        %s419 = sand.u32 %s78, 1
        %s420 = smul.addr %s419, 128
        %s421 = scalar_lea.vmem [#allocation5], %s420
        // Predicated region
        $region61: #{tpu_custom_call.1} parent=55 // pred_check
          %p422 = pneg %p91
        $region62: #{tpu_custom_call.1} parent=55 // pred_check_branch
          %424 = sbr.rel (%p422) target = $region64
        $region63: #{tpu_custom_call.1} parent=55 // pred_region
          %425 = dma.done %s418, 2048
        $region64: #{tpu_custom_call.1} parent=55 // pred_fallthru
          _
        %s426 = sand.u32 %s30, 1
        %s427 = scalar_lea.sflag [#allocation6], %s426
        %s428 = sand.u32 %s104, 1
        %s429 = smul.addr %s428, 256
        %s430 = scalar_lea.vmem [#allocation7], %s429
        // Predicated region
        $region65: #{tpu_custom_call.1} parent=55 // pred_check
          %p431 = pneg %p117
        $region66: #{tpu_custom_call.1} parent=55 // pred_check_branch
          %433 = sbr.rel (%p431) target = $region68
        $region67: #{tpu_custom_call.1} parent=55 // pred_region
          %434 = dma.done %s427, 4096
        $region68: #{tpu_custom_call.1} parent=55 // pred_fallthru
          _
        // Predicated region
        $region69: #{tpu_custom_call.1} parent=55 // pred_check
          %p435 = pneg %p164
        $region70: #{tpu_custom_call.1} parent=55 // pred_check_branch
          %437 = sbr.rel (%p435) target = $region72
        $region71: #{tpu_custom_call.1} parent=55 // pred_region
          %438 = dma.done [#allocation9], 2048
        $region72: #{tpu_custom_call.1} parent=55 // pred_fallthru
          _
        // Predicated region
        $region73: #{tpu_custom_call.1} parent=55 // pred_check
          %p439 = pneg %p227
        $region74: #{tpu_custom_call.1} parent=55 // pred_check_branch
          %441 = sbr.rel (%p439) target = $region76
        $region75: #{tpu_custom_call.1} parent=55 // pred_region
          %442 = dma.done [#allocation9], 2048
        $region76: #{tpu_custom_call.1} parent=55 // pred_fallthru
          _
        %s443 = sand.u32 %s52, 1
        %s444 = scalar_lea.sflag [#allocation3], %s443
        %s445 = sand.u32 %s52, 1
        %s446 = smul.addr %s445, 64
        %s447 = scalar_lea.vmem [#allocation2], %s446
        %p448 = pneg %p65
        %p449 = pneg %p62
        %s450 = sand.u32 %s30, 1
        %s451 = scalar_lea.sflag [#allocation6], %s450
        %s452 = sand.u32 %s78, 1
        %s453 = smul.addr %s452, 128
        %s454 = scalar_lea.vmem [#allocation5], %s453
        %p455 = pneg %p91
        %p456 = pneg %p88
        %s457 = sand.u32 %s30, 1
        %s458 = scalar_lea.sflag [#allocation6], %s457
        %s459 = sand.u32 %s104, 1
        %s460 = smul.addr %s459, 256
        %s461 = scalar_lea.vmem [#allocation7], %s460
        %p462 = pneg %p117
        %p463 = pneg %p114
        %p464 = scmp.lt.s32.totalorder %s34, 1
        %s465 = scalar_select %p464, %s34, 1
        %s466 = scalar_lea.vmem %s3, %s465
        %p467 = pneg %p143
        %p468 = pneg %p140
        %p469 = pneg %p164
        %p470 = pneg %p161
        %p471 = pneg %p185
        %p472 = pneg %p182
        %p473 = pneg %p206
        %p474 = pneg %p203
        %p475 = pneg %p227
        %p476 = pneg %p224
        %p477 = pneg %p248
        %p478 = pneg %p245
        %p479 = pneg %p276
        %p480 = pneg %p273
        %s481 = sand.u32 %s263, 1
        %s482 = scalar_lea.sflag [#allocation4], %s481
        %s483 = sand.u32 %s263, 1
        %s484 = smul.addr %s483, 64
        %s485 = scalar_lea.vmem [#allocation11], %s484
        %s486 = smul.u32 8, %s35
        %p487 = scmp.lt.s32.totalorder %s34, 1
        %s488 = scalar_select %p487, %s34, 1
        %s489 = scalar_lea.vmem %s3, %s488
        %s490 = smul.u32 8, %s35
        %v491 = vld [vmem:[%s412] sm:$0xff]
        %v492 = vld [vmem:[%s412 + $0x8] sm:$0xff]
        %v493 = vld [vmem:[%s412 + $0x10] sm:$0xff]
        %v494 = vld [vmem:[%s412 + $0x18] sm:$0xff]
        %v495 = vld [vmem:[%s412 + $0x20] sm:$0xff]
        %v496 = vld [vmem:[%s412 + $0x28] sm:$0xff]
        %v497 = vld [vmem:[%s412 + $0x30] sm:$0xff]
        %v498 = vld [vmem:[%s412 + $0x38] sm:$0xff]
        %v499 = vld [vmem:[#allocation8] sm:$0xff]
        %v500 = vld [vmem:[#allocation8 + $0x8] sm:$0xff]
        %v501 = vld [vmem:[#allocation8 + $0x10] sm:$0xff]
        %v502 = vld [vmem:[#allocation8 + $0x18] sm:$0xff]
        %v503 = vld [vmem:[#allocation8 + $0x20] sm:$0xff]
        %v504 = vld [vmem:[#allocation8 + $0x28] sm:$0xff]
        %v505 = vld [vmem:[#allocation8 + $0x30] sm:$0xff]
        %v506 = vld [vmem:[#allocation8 + $0x38] sm:$0xff]
        %v507 = vld [vmem:[#allocation8 + $0x40] sm:$0xff]
        %v508 = vld [vmem:[#allocation8 + $0x48] sm:$0xff]
        %v509 = vld [vmem:[#allocation8 + $0x50] sm:$0xff]
        %v510 = vld [vmem:[#allocation8 + $0x58] sm:$0xff]
        %v511 = vld [vmem:[#allocation8 + $0x60] sm:$0xff]
        %v512 = vld [vmem:[#allocation8 + $0x68] sm:$0xff]
        %v513 = vld [vmem:[#allocation8 + $0x70] sm:$0xff]
        %v514 = vld [vmem:[#allocation8 + $0x78] sm:$0xff]
        %v515 = vld [vmem:[%s5] sm:$0x1]
        %v517 = vlaneseq
        %v518 = vshrl.u32 %v517, 7
        %v519 = vsub.s32 0, %v518
        %v520 = vrot.slane %v515, %v519
        %522 = vmatprep.subr.mxu0 0.0
        %523 = vmatpush1.msra.mxu0 %v499
        %524 = vmatprep.subr.mxu0 0.0
        %525 = vmatpush1.msra.mxu0 %v500
        %526 = vmatprep.subr.mxu0 0.0
        %527 = vmatpush1.msra.mxu0 %v501
        %528 = vmatprep.subr.mxu0 0.0
        %529 = vmatpush1.msra.mxu0 %v502
        %530 = vmatprep.subr.mxu0 0.0
        %531 = vmatpush1.msra.mxu0 %v503
        %532 = vmatprep.subr.mxu0 0.0
        %533 = vmatpush1.msra.mxu0 %v504
        %534 = vmatprep.subr.mxu0 0.0
        %535 = vmatpush1.msra.mxu0 %v505
        %536 = vmatprep.subr.mxu0 0.0
        %537 = vmatpush1.msra.mxu0 %v506
        %538 = vmatprep.subr.mxu0 0.0
        %539 = vmatpush1.msra.mxu0 %v507
        %540 = vmatprep.subr.mxu0 0.0
        %541 = vmatpush1.msra.mxu0 %v508
        %542 = vmatprep.subr.mxu0 0.0
        %543 = vmatpush1.msra.mxu0 %v509
        %544 = vmatprep.subr.mxu0 0.0
        %545 = vmatpush1.msra.mxu0 %v510
        %546 = vmatprep.subr.mxu0 0.0
        %547 = vmatpush1.msra.mxu0 %v511
        %548 = vmatprep.subr.mxu0 0.0
        %549 = vmatpush1.msra.mxu0 %v512
        %550 = vmatprep.subr.mxu0 0.0
        %551 = vmatpush1.msra.mxu0 %v513
        %552 = vmatprep.subr.mxu0 0.0
        %553 = vmatpush1.msra.mxu0 %v514
        %554 = vmatprep.subr.mxu0 0.0
        %555 = vmatpush1.msra.mxu0 0.0
        %556 = vmatprep.subr.mxu0 0.0
        %557 = vmatpush1.msra.mxu0 0.0
        %558 = vmatprep.subr.mxu0 0.0
        %559 = vmatpush1.msra.mxu0 0.0
        %560 = vmatprep.subr.mxu0 0.0
        %561 = vmatpush1.msra.mxu0 0.0
        %562 = vmatprep.subr.mxu0 0.0
        %563 = vmatpush1.msra.mxu0 0.0
        %564 = vmatprep.subr.mxu0 0.0
        %565 = vmatpush1.msra.mxu0 0.0
        %566 = vmatprep.subr.mxu0 0.0
        %567 = vmatpush1.msra.mxu0 0.0
        %568 = vmatprep.subr.mxu0 0.0
        %569 = vmatpush1.msra.mxu0 0.0
        %570 = vmatprep.subr.mxu0 0.0
        %571 = vmatpush1.msra.mxu0 0.0
        %572 = vmatprep.subr.mxu0 0.0
        %573 = vmatpush1.msra.mxu0 0.0
        %574 = vmatprep.subr.mxu0 0.0
        %575 = vmatpush1.msra.mxu0 0.0
        %576 = vmatprep.subr.mxu0 0.0
        %577 = vmatpush1.msra.mxu0 0.0
        %578 = vmatprep.subr.mxu0 0.0
        %579 = vmatpush1.msra.mxu0 0.0
        %580 = vmatprep.subr.mxu0 0.0
        %581 = vmatpush1.msra.mxu0 0.0
        %582 = vmatprep.subr.mxu0 0.0
        %583 = vmatpush1.msra.mxu0 0.0
        %584 = vmatprep.subr.mxu0 0.0
        %585 = vmatpush1.msra.mxu0 0.0
        %586 = vmatprep.mubr.f32.mxu0 0.0
        %587 = vmatmul.mubr.f32.gmra.mrb[0].mxu0 %v491
        %v588 = vpop.f32.mrb[0].mxu0
        %v589 = vadd.f32 %v520, %v588
        %v590 = vpop.f32.mrb[0].mxu0
        %591 = vmatprep.mubr.f32.mxu0 0.0
        %592 = vmatmul.mubr.f32.gmra.mrb[0].mxu0 %v492
        %v593 = vpop.f32.mrb[0].mxu0
        %v594 = vadd.f32 %v520, %v593
        %v595 = vpop.f32.mrb[0].mxu0
        %596 = vmatprep.mubr.f32.mxu0 0.0
        %597 = vmatmul.mubr.f32.gmra.mrb[0].mxu0 %v493
        %v598 = vpop.f32.mrb[0].mxu0
        %v599 = vadd.f32 %v520, %v598
        %v600 = vpop.f32.mrb[0].mxu0
        %601 = vmatprep.mubr.f32.mxu0 0.0
        %602 = vmatmul.mubr.f32.gmra.mrb[0].mxu0 %v494
        %v603 = vpop.f32.mrb[0].mxu0
        %v604 = vadd.f32 %v520, %v603
        %v605 = vpop.f32.mrb[0].mxu0
        %606 = vmatprep.mubr.f32.mxu0 0.0
        %607 = vmatmul.mubr.f32.gmra.mrb[0].mxu0 %v495
        %v608 = vpop.f32.mrb[0].mxu0
        %v609 = vadd.f32 %v520, %v608
        %v610 = vpop.f32.mrb[0].mxu0
        %611 = vmatprep.mubr.f32.mxu0 0.0
        %612 = vmatmul.mubr.f32.gmra.mrb[0].mxu0 %v496
        %v613 = vpop.f32.mrb[0].mxu0
        %v614 = vadd.f32 %v520, %v613
        %v615 = vpop.f32.mrb[0].mxu0
        %616 = vmatprep.mubr.f32.mxu0 0.0
        %617 = vmatmul.mubr.f32.gmra.mrb[0].mxu0 %v497
        %v618 = vpop.f32.mrb[0].mxu0
        %v619 = vadd.f32 %v520, %v618
        %v620 = vpop.f32.mrb[0].mxu0
        %621 = vmatprep.mubr.f32.mxu0 0.0
        %622 = vmatmul.mubr.f32.gmra.mrb[0].mxu0 %v498
        %v623 = vpop.f32.mrb[0].mxu0
        %v624 = vadd.f32 %v520, %v623
        %v625 = vpop.f32.mrb[0].mxu0
        %626 = vdwg.mxu0
        %v627 = vld [vmem:[%s421] sm:$0xff]
        %v628 = vld [vmem:[%s421 + $0x8] sm:$0xff]
        %v629 = vld [vmem:[%s421 + $0x10] sm:$0xff]
        %v630 = vld [vmem:[%s421 + $0x18] sm:$0xff]
        %v631 = vld [vmem:[%s421 + $0x20] sm:$0xff]
        %v632 = vld [vmem:[%s421 + $0x28] sm:$0xff]
        %v633 = vld [vmem:[%s421 + $0x30] sm:$0xff]
        %v634 = vld [vmem:[%s421 + $0x38] sm:$0xff]
        %v635 = vld [vmem:[%s421 + $0x40] sm:$0xff]
        %v636 = vld [vmem:[%s421 + $0x48] sm:$0xff]
        %v637 = vld [vmem:[%s421 + $0x50] sm:$0xff]
        %v638 = vld [vmem:[%s421 + $0x58] sm:$0xff]
        %v639 = vld [vmem:[%s421 + $0x60] sm:$0xff]
        %v640 = vld [vmem:[%s421 + $0x68] sm:$0xff]
        %v641 = vld [vmem:[%s421 + $0x70] sm:$0xff]
        %v642 = vld [vmem:[%s421 + $0x78] sm:$0xff]
        %v643 = vld [vmem:[%s489] sm:$0x1]
        %v645 = vlaneseq
        %v646 = vshrl.u32 %v645, 7
        %v647 = vsub.s32 0, %v646
        %v648 = vrot.slane %v643, %v647
        %650 = vmatprep.subr.mxu0 0.0
        %651 = vmatpush1.msra.mxu0 %v627
        %652 = vmatprep.subr.mxu0 0.0
        %653 = vmatpush1.msra.mxu0 %v628
        %654 = vmatprep.subr.mxu0 0.0
        %655 = vmatpush1.msra.mxu0 %v629
        %656 = vmatprep.subr.mxu0 0.0
        %657 = vmatpush1.msra.mxu0 %v630
        %658 = vmatprep.subr.mxu0 0.0
        %659 = vmatpush1.msra.mxu0 %v631
        %660 = vmatprep.subr.mxu0 0.0
        %661 = vmatpush1.msra.mxu0 %v632
        %662 = vmatprep.subr.mxu0 0.0
        %663 = vmatpush1.msra.mxu0 %v633
        %664 = vmatprep.subr.mxu0 0.0
        %665 = vmatpush1.msra.mxu0 %v634
        %666 = vmatprep.subr.mxu0 0.0
        %667 = vmatpush1.msra.mxu0 %v635
        %668 = vmatprep.subr.mxu0 0.0
        %669 = vmatpush1.msra.mxu0 %v636
        %670 = vmatprep.subr.mxu0 0.0
        %671 = vmatpush1.msra.mxu0 %v637
        %672 = vmatprep.subr.mxu0 0.0
        %673 = vmatpush1.msra.mxu0 %v638
        %674 = vmatprep.subr.mxu0 0.0
        %675 = vmatpush1.msra.mxu0 %v639
        %676 = vmatprep.subr.mxu0 0.0
        %677 = vmatpush1.msra.mxu0 %v640
        %678 = vmatprep.subr.mxu0 0.0
        %679 = vmatpush1.msra.mxu0 %v641
        %680 = vmatprep.subr.mxu0 0.0
        %681 = vmatpush1.msra.mxu0 %v642
        %682 = vmatprep.subr.mxu0 0.0
        %683 = vmatpush1.msra.mxu0 0.0
        %684 = vmatprep.subr.mxu0 0.0
        %685 = vmatpush1.msra.mxu0 0.0
        %686 = vmatprep.subr.mxu0 0.0
        %687 = vmatpush1.msra.mxu0 0.0
        %688 = vmatprep.subr.mxu0 0.0
        %689 = vmatpush1.msra.mxu0 0.0
        %690 = vmatprep.subr.mxu0 0.0
        %691 = vmatpush1.msra.mxu0 0.0
        %692 = vmatprep.subr.mxu0 0.0
        %693 = vmatpush1.msra.mxu0 0.0
        %694 = vmatprep.subr.mxu0 0.0
        %695 = vmatpush1.msra.mxu0 0.0
        %696 = vmatprep.subr.mxu0 0.0
        %697 = vmatpush1.msra.mxu0 0.0
        %698 = vmatprep.subr.mxu0 0.0
        %699 = vmatpush1.msra.mxu0 0.0
        %700 = vmatprep.subr.mxu0 0.0
        %701 = vmatpush1.msra.mxu0 0.0
        %702 = vmatprep.subr.mxu0 0.0
        %703 = vmatpush1.msra.mxu0 0.0
        %704 = vmatprep.subr.mxu0 0.0
        %705 = vmatpush1.msra.mxu0 0.0
        %706 = vmatprep.subr.mxu0 0.0
        %707 = vmatpush1.msra.mxu0 0.0
        %708 = vmatprep.subr.mxu0 0.0
        %709 = vmatpush1.msra.mxu0 0.0
        %710 = vmatprep.subr.mxu0 0.0
        %711 = vmatpush1.msra.mxu0 0.0
        %712 = vmatprep.subr.mxu0 0.0
        %713 = vmatpush1.msra.mxu0 0.0
        %714 = vmatprep.mubr.f32.mxu0 0.0
        %715 = vmatmul.mubr.f32.gmra.mrb[0].mxu0 %v589
        %v716 = vpop.f32.mrb[0].mxu0
        %v717 = vadd.f32 %v648, %v716
        %v718 = vpop.f32.mrb[0].mxu0
        %719 = vmatprep.mubr.f32.mxu0 0.0
        %720 = vmatmul.mubr.f32.gmra.mrb[0].mxu0 %v594
        %v721 = vpop.f32.mrb[0].mxu0
        %v722 = vadd.f32 %v648, %v721
        %v723 = vpop.f32.mrb[0].mxu0
        %724 = vmatprep.mubr.f32.mxu0 0.0
        %725 = vmatmul.mubr.f32.gmra.mrb[0].mxu0 %v599
        %v726 = vpop.f32.mrb[0].mxu0
        %v727 = vadd.f32 %v648, %v726
        %v728 = vpop.f32.mrb[0].mxu0
        %729 = vmatprep.mubr.f32.mxu0 0.0
        %730 = vmatmul.mubr.f32.gmra.mrb[0].mxu0 %v604
        %v731 = vpop.f32.mrb[0].mxu0
        %v732 = vadd.f32 %v648, %v731
        %v733 = vpop.f32.mrb[0].mxu0
        %734 = vmatprep.mubr.f32.mxu0 0.0
        %735 = vmatmul.mubr.f32.gmra.mrb[0].mxu0 %v609
        %v736 = vpop.f32.mrb[0].mxu0
        %v737 = vadd.f32 %v648, %v736
        %v738 = vpop.f32.mrb[0].mxu0
        %739 = vmatprep.mubr.f32.mxu0 0.0
        %740 = vmatmul.mubr.f32.gmra.mrb[0].mxu0 %v614
        %v741 = vpop.f32.mrb[0].mxu0
        %v742 = vadd.f32 %v648, %v741
        %v743 = vpop.f32.mrb[0].mxu0
        %744 = vmatprep.mubr.f32.mxu0 0.0
        %745 = vmatmul.mubr.f32.gmra.mrb[0].mxu0 %v619
        %v746 = vpop.f32.mrb[0].mxu0
        %v747 = vadd.f32 %v648, %v746
        %v748 = vpop.f32.mrb[0].mxu0
        %749 = vmatprep.mubr.f32.mxu0 0.0
        %750 = vmatmul.mubr.f32.gmra.mrb[0].mxu0 %v624
        %v751 = vpop.f32.mrb[0].mxu0
        %v752 = vadd.f32 %v648, %v751
        %v753 = vpop.f32.mrb[0].mxu0
        %754 = vdwg.mxu0
        %755 = vmax.xlane.f32.xlu0 %v717
        %v756 = vpop.xlane.xlu0 %755
        %757 = vmax.xlane.f32.xlu0 %v722
        %v758 = vpop.xlane.xlu0 %757
        %759 = vmax.xlane.f32.xlu0 %v727
        %v760 = vpop.xlane.xlu0 %759
        %761 = vmax.xlane.f32.xlu0 %v732
        %v762 = vpop.xlane.xlu0 %761
        %763 = vmax.xlane.f32.xlu0 %v737
        %v764 = vpop.xlane.xlu0 %763
        %765 = vmax.xlane.f32.xlu0 %v742
        %v766 = vpop.xlane.xlu0 %765
        %767 = vmax.xlane.f32.xlu0 %v747
        %v768 = vpop.xlane.xlu0 %767
        %769 = vmax.xlane.f32.xlu0 %v752
        %v770 = vpop.xlane.xlu0 %769
        %v771 = vsub.f32 %v717, %v756
        %v772 = vsub.f32 %v722, %v758
        %v773 = vsub.f32 %v727, %v760
        %v774 = vsub.f32 %v732, %v762
        %v775 = vsub.f32 %v737, %v764
        %v776 = vsub.f32 %v742, %v766
        %v777 = vsub.f32 %v747, %v768
        %v778 = vsub.f32 %v752, %v770
        %v779 = vmul.f32 %v771, 1.442695
        %v780 = vpow.pop %v779
        %v781 = vmul.f32 %v772, 1.442695
        %v782 = vpow.pop %v781
        %v783 = vmul.f32 %v773, 1.442695
        %v784 = vpow.pop %v783
        %v785 = vmul.f32 %v774, 1.442695
        %v786 = vpow.pop %v785
        %v787 = vmul.f32 %v775, 1.442695
        %v788 = vpow.pop %v787
        %v789 = vmul.f32 %v776, 1.442695
        %v790 = vpow.pop %v789
        %v791 = vmul.f32 %v777, 1.442695
        %v792 = vpow.pop %v791
        %v793 = vmul.f32 %v778, 1.442695
        %v794 = vpow.pop %v793
        %795 = vadd.xlane.f32.xlu0 %v780
        %v796 = vpop.xlane.xlu0 %795
        %797 = vadd.xlane.f32.xlu0 %v782
        %v798 = vpop.xlane.xlu0 %797
        %799 = vadd.xlane.f32.xlu0 %v784
        %v800 = vpop.xlane.xlu0 %799
        %801 = vadd.xlane.f32.xlu0 %v786
        %v802 = vpop.xlane.xlu0 %801
        %803 = vadd.xlane.f32.xlu0 %v788
        %v804 = vpop.xlane.xlu0 %803
        %805 = vadd.xlane.f32.xlu0 %v790
        %v806 = vpop.xlane.xlu0 %805
        %807 = vadd.xlane.f32.xlu0 %v792
        %v808 = vpop.xlane.xlu0 %807
        %809 = vadd.xlane.f32.xlu0 %v794
        %v810 = vpop.xlane.xlu0 %809
        %v811 = vrcp.pop %v796
        %v812 = vrcp.pop %v798
        %v813 = vrcp.pop %v800
        %v814 = vrcp.pop %v802
        %v815 = vrcp.pop %v804
        %v816 = vrcp.pop %v806
        %v817 = vrcp.pop %v808
        %v818 = vrcp.pop %v810
        %v819 = vmul.f32 %v780, %v811
        %v820 = vmul.f32 %v782, %v812
        %v821 = vmul.f32 %v784, %v813
        %v822 = vmul.f32 %v786, %v814
        %v823 = vmul.f32 %v788, %v815
        %v824 = vmul.f32 %v790, %v816
        %v825 = vmul.f32 %v792, %v817
        %v826 = vmul.f32 %v794, %v818
        %v827 = vld [vmem:[%s430] sm:$0xff]
        %v828 = vld [vmem:[%s430 + $0x8] sm:$0xff]
        %v829 = vld [vmem:[%s430 + $0x10] sm:$0xff]
        %v830 = vld [vmem:[%s430 + $0x18] sm:$0xff]
        %v831 = vld [vmem:[%s430 + $0x20] sm:$0xff]
        %v832 = vld [vmem:[%s430 + $0x28] sm:$0xff]
        %v833 = vld [vmem:[%s430 + $0x30] sm:$0xff]
        %v834 = vld [vmem:[%s430 + $0x38] sm:$0xff]
        %v835 = vld [vmem:[%s430 + $0x40] sm:$0xff]
        %v836 = vld [vmem:[%s430 + $0x48] sm:$0xff]
        %v837 = vld [vmem:[%s430 + $0x50] sm:$0xff]
        %v838 = vld [vmem:[%s430 + $0x58] sm:$0xff]
        %v839 = vld [vmem:[%s430 + $0x60] sm:$0xff]
        %v840 = vld [vmem:[%s430 + $0x68] sm:$0xff]
        %v841 = vld [vmem:[%s430 + $0x70] sm:$0xff]
        %v842 = vld [vmem:[%s430 + $0x78] sm:$0xff]
        %v843 = vld [vmem:[%s430 + $0x80] sm:$0xff]
        %v844 = vld [vmem:[%s430 + $0x88] sm:$0xff]
        %v845 = vld [vmem:[%s430 + $0x90] sm:$0xff]
        %v846 = vld [vmem:[%s430 + $0x98] sm:$0xff]
        %v847 = vld [vmem:[%s430 + $0xa0] sm:$0xff]
        %v848 = vld [vmem:[%s430 + $0xa8] sm:$0xff]
        %v849 = vld [vmem:[%s430 + $0xb0] sm:$0xff]
        %v850 = vld [vmem:[%s430 + $0xb8] sm:$0xff]
        %v851 = vld [vmem:[%s430 + $0xc0] sm:$0xff]
        %v852 = vld [vmem:[%s430 + $0xc8] sm:$0xff]
        %v853 = vld [vmem:[%s430 + $0xd0] sm:$0xff]
        %v854 = vld [vmem:[%s430 + $0xd8] sm:$0xff]
        %v855 = vld [vmem:[%s430 + $0xe0] sm:$0xff]
        %v856 = vld [vmem:[%s430 + $0xe8] sm:$0xff]
        %v857 = vld [vmem:[%s430 + $0xf0] sm:$0xff]
        %v858 = vld [vmem:[%s430 + $0xf8] sm:$0xff]
        %v859 = vld [vmem:[%s6] sm:$0x1]
        %v861 = vlaneseq
        %v862 = vshrl.u32 %v861, 7
        %v863 = vsub.s32 0, %v862
        %v864 = vrot.slane %v859, %v863
        %866 = vmatprep.subr.mxu0 0.0
        %867 = vmatpush1.msra.mxu0 %v827
        %868 = vmatprep.subr.mxu0 0.0
        %869 = vmatpush1.msra.mxu0 %v828
        %870 = vmatprep.subr.mxu0 0.0
        %871 = vmatpush1.msra.mxu0 %v829
        %872 = vmatprep.subr.mxu0 0.0
        %873 = vmatpush1.msra.mxu0 %v830
        %874 = vmatprep.subr.mxu0 0.0
        %875 = vmatpush1.msra.mxu0 %v831
        %876 = vmatprep.subr.mxu0 0.0
        %877 = vmatpush1.msra.mxu0 %v832
        %878 = vmatprep.subr.mxu0 0.0
        %879 = vmatpush1.msra.mxu0 %v833
        %880 = vmatprep.subr.mxu0 0.0
        %881 = vmatpush1.msra.mxu0 %v834
        %882 = vmatprep.subr.mxu0 0.0
        %883 = vmatpush1.msra.mxu0 %v835
        %884 = vmatprep.subr.mxu0 0.0
        %885 = vmatpush1.msra.mxu0 %v836
        %886 = vmatprep.subr.mxu0 0.0
        %887 = vmatpush1.msra.mxu0 %v837
        %888 = vmatprep.subr.mxu0 0.0
        %889 = vmatpush1.msra.mxu0 %v838
        %890 = vmatprep.subr.mxu0 0.0
        %891 = vmatpush1.msra.mxu0 %v839
        %892 = vmatprep.subr.mxu0 0.0
        %893 = vmatpush1.msra.mxu0 %v840
        %894 = vmatprep.subr.mxu0 0.0
        %895 = vmatpush1.msra.mxu0 %v841
        %896 = vmatprep.subr.mxu0 0.0
        %897 = vmatpush1.msra.mxu0 %v842
        %898 = vmatprep.subr.mxu0 0.0
        %899 = vmatpush1.msra.mxu0 %v843
        %900 = vmatprep.subr.mxu0 0.0
        %901 = vmatpush1.msra.mxu0 %v844
        %902 = vmatprep.subr.mxu0 0.0
        %903 = vmatpush1.msra.mxu0 %v845
        %904 = vmatprep.subr.mxu0 0.0
        %905 = vmatpush1.msra.mxu0 %v846
        %906 = vmatprep.subr.mxu0 0.0
        %907 = vmatpush1.msra.mxu0 %v847
        %908 = vmatprep.subr.mxu0 0.0
        %909 = vmatpush1.msra.mxu0 %v848
        %910 = vmatprep.subr.mxu0 0.0
        %911 = vmatpush1.msra.mxu0 %v849
        %912 = vmatprep.subr.mxu0 0.0
        %913 = vmatpush1.msra.mxu0 %v850
        %914 = vmatprep.subr.mxu0 0.0
        %915 = vmatpush1.msra.mxu0 %v851
        %916 = vmatprep.subr.mxu0 0.0
        %917 = vmatpush1.msra.mxu0 %v852
        %918 = vmatprep.subr.mxu0 0.0
        %919 = vmatpush1.msra.mxu0 %v853
        %920 = vmatprep.subr.mxu0 0.0
        %921 = vmatpush1.msra.mxu0 %v854
        %922 = vmatprep.subr.mxu0 0.0
        %923 = vmatpush1.msra.mxu0 %v855
        %924 = vmatprep.subr.mxu0 0.0
        %925 = vmatpush1.msra.mxu0 %v856
        %926 = vmatprep.subr.mxu0 0.0
        %927 = vmatpush1.msra.mxu0 %v857
        %928 = vmatprep.subr.mxu0 0.0
        %929 = vmatpush1.msra.mxu0 %v858
        %930 = vmatprep.mubr.f32.mxu0 %v589
        %931 = vmatmul.mubr.f32.gmra.mrb[0].mxu0 %v819
        %v932 = vpop.f32.mrb[0].mxu0
        %v933 = vadd.f32 %v864, %v932
        %v934 = vpop.f32.mrb[0].mxu0
        %935 = vmatprep.mubr.f32.mxu0 %v594
        %936 = vmatmul.mubr.f32.gmra.mrb[0].mxu0 %v820
        %v937 = vpop.f32.mrb[0].mxu0
        %v938 = vadd.f32 %v864, %v937
        %v939 = vpop.f32.mrb[0].mxu0
        %940 = vmatprep.mubr.f32.mxu0 %v599
        %941 = vmatmul.mubr.f32.gmra.mrb[0].mxu0 %v821
        %v942 = vpop.f32.mrb[0].mxu0
        %v943 = vadd.f32 %v864, %v942
        %v944 = vpop.f32.mrb[0].mxu0
        %945 = vmatprep.mubr.f32.mxu0 %v604
        %946 = vmatmul.mubr.f32.gmra.mrb[0].mxu0 %v822
        %v947 = vpop.f32.mrb[0].mxu0
        %v948 = vadd.f32 %v864, %v947
        %v949 = vpop.f32.mrb[0].mxu0
        %950 = vmatprep.mubr.f32.mxu0 %v609
        %951 = vmatmul.mubr.f32.gmra.mrb[0].mxu0 %v823
        %v952 = vpop.f32.mrb[0].mxu0
        %v953 = vadd.f32 %v864, %v952
        %v954 = vpop.f32.mrb[0].mxu0
        %955 = vmatprep.mubr.f32.mxu0 %v614
        %956 = vmatmul.mubr.f32.gmra.mrb[0].mxu0 %v824
        %v957 = vpop.f32.mrb[0].mxu0
        %v958 = vadd.f32 %v864, %v957
        %v959 = vpop.f32.mrb[0].mxu0
        %960 = vmatprep.mubr.f32.mxu0 %v619
        %961 = vmatmul.mubr.f32.gmra.mrb[0].mxu0 %v825
        %v962 = vpop.f32.mrb[0].mxu0
        %v963 = vadd.f32 %v864, %v962
        %v964 = vpop.f32.mrb[0].mxu0
        %965 = vmatprep.mubr.f32.mxu0 %v624
        %966 = vmatmul.mubr.f32.gmra.mrb[0].mxu0 %v826
        %v967 = vpop.f32.mrb[0].mxu0
        %v968 = vadd.f32 %v864, %v967
        %v969 = vpop.f32.mrb[0].mxu0
        %970 = vdwg.mxu0
        %v971 = vmax.f32 %v933, 0.0
        %v972 = vmax.f32 %v938, 0.0
        %v973 = vmax.f32 %v943, 0.0
        %v974 = vmax.f32 %v948, 0.0
        %v975 = vmax.f32 %v953, 0.0
        %v976 = vmax.f32 %v958, 0.0
        %v977 = vmax.f32 %v963, 0.0
        %v978 = vmax.f32 %v968, 0.0
        %v979 = vld [vmem:[#allocation10] sm:$0xff]
        %v980 = vld [vmem:[#allocation10 + $0x8] sm:$0xff]
        %v981 = vld [vmem:[#allocation10 + $0x10] sm:$0xff]
        %v982 = vld [vmem:[#allocation10 + $0x18] sm:$0xff]
        %v983 = vld [vmem:[#allocation10 + $0x20] sm:$0xff]
        %v984 = vld [vmem:[#allocation10 + $0x28] sm:$0xff]
        %v985 = vld [vmem:[#allocation10 + $0x30] sm:$0xff]
        %v986 = vld [vmem:[#allocation10 + $0x38] sm:$0xff]
        %v987 = vld [vmem:[#allocation10 + $0x40] sm:$0xff]
        %v988 = vld [vmem:[#allocation10 + $0x48] sm:$0xff]
        %v989 = vld [vmem:[#allocation10 + $0x50] sm:$0xff]
        %v990 = vld [vmem:[#allocation10 + $0x58] sm:$0xff]
        %v991 = vld [vmem:[#allocation10 + $0x60] sm:$0xff]
        %v992 = vld [vmem:[#allocation10 + $0x68] sm:$0xff]
        %v993 = vld [vmem:[#allocation10 + $0x70] sm:$0xff]
        %v994 = vld [vmem:[#allocation10 + $0x78] sm:$0xff]
        %995 = vmatprep.subr.mxu0 0.0
        %996 = vmatpush1.msra.mxu0 %v979
        %997 = vmatprep.subr.mxu0 0.0
        %998 = vmatpush1.msra.mxu0 %v980
        %999 = vmatprep.subr.mxu0 0.0
        %1000 = vmatpush1.msra.mxu0 %v981
        %1001 = vmatprep.subr.mxu0 0.0
        %1002 = vmatpush1.msra.mxu0 %v982
        %1003 = vmatprep.subr.mxu0 0.0
        %1004 = vmatpush1.msra.mxu0 %v983
        %1005 = vmatprep.subr.mxu0 0.0
        %1006 = vmatpush1.msra.mxu0 %v984
        %1007 = vmatprep.subr.mxu0 0.0
        %1008 = vmatpush1.msra.mxu0 %v985
        %1009 = vmatprep.subr.mxu0 0.0
        %1010 = vmatpush1.msra.mxu0 %v986
        %1011 = vmatprep.subr.mxu0 0.0
        %1012 = vmatpush1.msra.mxu0 %v987
        %1013 = vmatprep.subr.mxu0 0.0
        %1014 = vmatpush1.msra.mxu0 %v988
        %1015 = vmatprep.subr.mxu0 0.0
        %1016 = vmatpush1.msra.mxu0 %v989
        %1017 = vmatprep.subr.mxu0 0.0
        %1018 = vmatpush1.msra.mxu0 %v990
        %1019 = vmatprep.subr.mxu0 0.0
        %1020 = vmatpush1.msra.mxu0 %v991
        %1021 = vmatprep.subr.mxu0 0.0
        %1022 = vmatpush1.msra.mxu0 %v992
        %1023 = vmatprep.subr.mxu0 0.0
        %1024 = vmatpush1.msra.mxu0 %v993
        %1025 = vmatprep.subr.mxu0 0.0
        %1026 = vmatpush1.msra.mxu0 %v994
        %1027 = vmatprep.subr.mxu0 0.0
        %1028 = vmatpush1.msra.mxu0 0.0
        %1029 = vmatprep.subr.mxu0 0.0
        %1030 = vmatpush1.msra.mxu0 0.0
        %1031 = vmatprep.subr.mxu0 0.0
        %1032 = vmatpush1.msra.mxu0 0.0
        %1033 = vmatprep.subr.mxu0 0.0
        %1034 = vmatpush1.msra.mxu0 0.0
        %1035 = vmatprep.subr.mxu0 0.0
        %1036 = vmatpush1.msra.mxu0 0.0
        %1037 = vmatprep.subr.mxu0 0.0
        %1038 = vmatpush1.msra.mxu0 0.0
        %1039 = vmatprep.subr.mxu0 0.0
        %1040 = vmatpush1.msra.mxu0 0.0
        %1041 = vmatprep.subr.mxu0 0.0
        %1042 = vmatpush1.msra.mxu0 0.0
        %1043 = vmatprep.subr.mxu0 0.0
        %1044 = vmatpush1.msra.mxu0 0.0
        %1045 = vmatprep.subr.mxu0 0.0
        %1046 = vmatpush1.msra.mxu0 0.0
        %1047 = vmatprep.subr.mxu0 0.0
        %1048 = vmatpush1.msra.mxu0 0.0
        %1049 = vmatprep.subr.mxu0 0.0
        %1050 = vmatpush1.msra.mxu0 0.0
        %1051 = vmatprep.subr.mxu0 0.0
        %1052 = vmatpush1.msra.mxu0 0.0
        %1053 = vmatprep.subr.mxu0 0.0
        %1054 = vmatpush1.msra.mxu0 0.0
        %1055 = vmatprep.subr.mxu0 0.0
        %1056 = vmatpush1.msra.mxu0 0.0
        %1057 = vmatprep.subr.mxu0 0.0
        %1058 = vmatpush1.msra.mxu0 0.0
        %1059 = vmatprep.mubr.f32.mxu0 0.0
        %1060 = vmatmul.mubr.f32.gmra.mrb[0].mxu0 %v971
        %v1061 = vpop.f32.mrb[0].mxu0
        %v1062 = vadd.f32 0.0, %v1061
        %v1063 = vpop.f32.mrb[0].mxu0
        %1064 = vmatprep.mubr.f32.mxu0 0.0
        %1065 = vmatmul.mubr.f32.gmra.mrb[0].mxu0 %v972
        %v1066 = vpop.f32.mrb[0].mxu0
        %v1067 = vadd.f32 0.0, %v1066
        %v1068 = vpop.f32.mrb[0].mxu0
        %1069 = vmatprep.mubr.f32.mxu0 0.0
        %1070 = vmatmul.mubr.f32.gmra.mrb[0].mxu0 %v973
        %v1071 = vpop.f32.mrb[0].mxu0
        %v1072 = vadd.f32 0.0, %v1071
        %v1073 = vpop.f32.mrb[0].mxu0
        %1074 = vmatprep.mubr.f32.mxu0 0.0
        %1075 = vmatmul.mubr.f32.gmra.mrb[0].mxu0 %v974
        %v1076 = vpop.f32.mrb[0].mxu0
        %v1077 = vadd.f32 0.0, %v1076
        %v1078 = vpop.f32.mrb[0].mxu0
        %1079 = vmatprep.mubr.f32.mxu0 0.0
        %1080 = vmatmul.mubr.f32.gmra.mrb[0].mxu0 %v975
        %v1081 = vpop.f32.mrb[0].mxu0
        %v1082 = vadd.f32 0.0, %v1081
        %v1083 = vpop.f32.mrb[0].mxu0
        %1084 = vmatprep.mubr.f32.mxu0 0.0
        %1085 = vmatmul.mubr.f32.gmra.mrb[0].mxu0 %v976
        %v1086 = vpop.f32.mrb[0].mxu0
        %v1087 = vadd.f32 0.0, %v1086
        %v1088 = vpop.f32.mrb[0].mxu0
        %1089 = vmatprep.mubr.f32.mxu0 0.0
        %1090 = vmatmul.mubr.f32.gmra.mrb[0].mxu0 %v977
        %v1091 = vpop.f32.mrb[0].mxu0
        %v1092 = vadd.f32 0.0, %v1091
        %v1093 = vpop.f32.mrb[0].mxu0
        %1094 = vmatprep.mubr.f32.mxu0 0.0
        %1095 = vmatmul.mubr.f32.gmra.mrb[0].mxu0 %v978
        %v1096 = vpop.f32.mrb[0].mxu0
        %v1097 = vadd.f32 0.0, %v1096
        %v1098 = vpop.f32.mrb[0].mxu0
        %1099 = vdwg.mxu0
        %v1100 = vadd.f32 %v491, %v1062
        %v1101 = vadd.f32 %v492, %v1067
        %v1102 = vadd.f32 %v493, %v1072
        %v1103 = vadd.f32 %v494, %v1077
        %v1104 = vadd.f32 %v495, %v1082
        %v1105 = vadd.f32 %v496, %v1087
        %v1106 = vadd.f32 %v497, %v1092
        %v1107 = vadd.f32 %v498, %v1097
        %v1108 = vld [vmem:[%s8] sm:$0x1]
        %v1110 = vlaneseq
        %v1111 = vshrl.u32 %v1110, 7
        %v1112 = vsub.s32 0, %v1111
        %v1113 = vrot.slane %v1108, %v1112
        %v1115 = vadd.f32 %v1100, %v1113
        %v1116 = vadd.f32 %v1101, %v1113
        %v1117 = vadd.f32 %v1102, %v1113
        %v1118 = vadd.f32 %v1103, %v1113
        %v1119 = vadd.f32 %v1104, %v1113
        %v1120 = vadd.f32 %v1105, %v1113
        %v1121 = vadd.f32 %v1106, %v1113
        %v1122 = vadd.f32 %v1107, %v1113
        %v1123 = vmax.f32 %v1115, 0.0
        %v1124 = vmax.f32 %v1116, 0.0
        %v1125 = vmax.f32 %v1117, 0.0
        %v1126 = vmax.f32 %v1118, 0.0
        %v1127 = vmax.f32 %v1119, 0.0
        %v1128 = vmax.f32 %v1120, 0.0
        %v1129 = vmax.f32 %v1121, 0.0
        %v1130 = vmax.f32 %v1122, 0.0
        %1131 = vst [vmem:[%s485] sm:$0xff] %v1123
        %1132 = vst [vmem:[%s485 + $0x8] sm:$0xff] %v1124
        %1133 = vst [vmem:[%s485 + $0x10] sm:$0xff] %v1125
        %1134 = vst [vmem:[%s485 + $0x18] sm:$0xff] %v1126
        %1135 = vst [vmem:[%s485 + $0x20] sm:$0xff] %v1127
        %1136 = vst [vmem:[%s485 + $0x28] sm:$0xff] %v1128
        %1137 = vst [vmem:[%s485 + $0x30] sm:$0xff] %v1129
        %1138 = vst [vmem:[%s485 + $0x38] sm:$0xff] %v1130
        %s1139 = sand.u32 %s263, 1
        %s1140 = scalar_lea.sflag [#allocation4], %s1139
        %s1141 = sand.u32 %s263, 1
        %s1142 = smul.addr %s1141, 64
        %s1143 = scalar_lea.vmem [#allocation11], %s1142
        // Predicated region
        $region77: #{tpu_custom_call.1} parent=55 // pred_check
          %p1144 = pneg %p273
        $region78: #{tpu_custom_call.1} parent=55 // pred_check_branch
          %1146 = sbr.rel (%p1144) target = $region80
        $region79: #{tpu_custom_call.1} parent=55 // pred_region
          %s1147 = smul.u32 8, %s35
          %s1149 = ssub.s32 1024, 1024
          %1150 = vsyncadd %s1140, %s1149
          %s1151 = smul.addr %s34, 8
          %s1152 = sadd.s32 %s1147, %s1151
          %s1153 = smul.addr %s1152, 128
          %s1154 = scalar_lea.hbm %s9, %s1153
          %s1155 = sshll.u32 %s1143, 4
          %s1156 = int_to_ptr.vmem [resolvable:$true] %s1155
          %1161 = dma.vmem_to_hbm [thread:$0]  %s1156, 1024, %s1154, %s1140, 128, 128, 8
        $region80: #{tpu_custom_call.1} parent=55 // pred_fallthru
          _
      $region56: #{tpu_custom_call.1} parent=5 // pred_fallthru
        _
      %p1162 = scmp.le.s32.totalorder 2, %s25
      // Predicated region
      $region81: #{tpu_custom_call.1} parent=5 // pred_check
        %p1163 = pneg %p1162
      $region82: #{tpu_custom_call.1} parent=5 // pred_check_branch
        %1165 = sbr.rel (%p1163) target = $region84
      $region83: #{tpu_custom_call.1} parent=5 // pred_region
        %s1166 = ssub.s32 %s25, 2
        // Predicated region
        $region85: #{tpu_custom_call.1} parent=83 // pred_check
          %p1167 = pneg %p279
        $region86: #{tpu_custom_call.1} parent=83 // pred_check_branch
          %1169 = sbr.rel (%p1167) target = $region88
        $region87: #{tpu_custom_call.1} parent=83 // pred_region
          %s1170 = sand.u32 %s264, 1
          %s1171 = scalar_lea.sflag [#allocation4], %s1170
          %s1172 = sand.u32 %s264, 1
          %s1173 = smul.addr %s1172, 64
          %s1174 = scalar_lea.vmem [#allocation11], %s1173
          %1175 = dma.done %s1171, 1024
        $region88: #{tpu_custom_call.1} parent=83 // pred_fallthru
          _
      $region84: #{tpu_custom_call.1} parent=5 // pred_fallthru
        _
    $region6: #{tpu_custom_call.1} parent=1 // loop_footer
      %s29 = sadd.s32 1, %s25
    $region7: #{tpu_custom_call.1} parent=1 // loop_footer_branch
      %24 = sbr.rel target = $region3
    $region8: #{tpu_custom_call.1} parent=1 // loop_exit
      _
    %1176 = vsyncpa [#allocation3], 1
    %s1177 = scalar_lea.sflag [#allocation3], 1
    %1178 = vsyncpa %s1177, 1
    %1179 = vsyncpa [#allocation6], 1
    %s1180 = scalar_lea.sflag [#allocation6], 1
    %1181 = vsyncpa %s1180, 1
    %1182 = vsyncpa [#allocation9], 1
    %1183 = vsyncpa [#allocation4], 1
    %s1184 = scalar_lea.sflag [#allocation4], 1
    %1185 = vsyncpa %s1184, 1

// kernel: tpu_custom_call.1
$region0: #{tpu_custom_call.1}
  #allocation0 [shape = 'u32[]', space=smem, size = 0x4, offset = 0x4, fixed_abs, tag = 'smem constant byte address 0x4 - core index']
  #allocation1 [shape = 'u32[144,128]{1,0:T(1,128)}', space=vmem, size = 0x12000, scoped, tag = 'internal scratch']
  %s0 = inlined_call_operand.hbm [shape: f32[2,64,128], index: 0, kind: input, shape index: {}]
  %s1 = inlined_call_operand.hbm [shape: f32[2,128,128], index: 1, kind: input, shape index: {}]
  %s2 = inlined_call_operand.hbm [shape: f32[2,256,128], index: 2, kind: input, shape index: {}]
  %s3 = inlined_call_operand.vmem [shape: f32[2,1,128], index: 3, kind: input, shape index: {}]
  %s4 = inlined_call_operand.hbm [shape: f32[128,128], index: 4, kind: input, shape index: {}]
  %s5 = inlined_call_operand.vmem [shape: f32[1,128], index: 5, kind: input, shape index: {}]
  %s6 = inlined_call_operand.vmem [shape: f32[1,128], index: 6, kind: input, shape index: {}]
  %s7 = inlined_call_operand.hbm [shape: f32[128,128], index: 7, kind: input, shape index: {}]
  %s8 = inlined_call_operand.vmem [shape: f32[1,128], index: 8, kind: input, shape index: {}]
  %s9 = inlined_call_operand.hbm [shape: f32[2,64,128], index: 9, kind: output, shape index: {}]
  %s10 = sld [smem:[#allocation0]]
  $region89: #{tpu_custom_call.1} parent=0
    _
  %s12 = ssub.s32 1, %s10
  %s13 = scalar_select 0, %s12, %s10
  $region1: #{tpu_custom_call.1} parent=0
    #allocation2 [shape = 'u8[65536]{0}', space=vmem, size = 0x10000, scoped, tag = 'input window, operand 0']
    #allocation3 [shape = 's32[2]{0}', space=sflag, size = 0x8, scoped, tag = 'scoped memory for tpu_custom_call.1']
    #allocation4 [shape = 's32[2]{0}', space=sflag, size = 0x8, scoped, tag = 'scoped memory for tpu_custom_call.1']
    #allocation5 [shape = 'u8[131072]{0}', space=vmem, size = 0x20000, scoped, tag = 'input window, operand 1']
    #allocation6 [shape = 's32[2]{0}', space=sflag, size = 0x8, scoped, tag = 'scoped memory for tpu_custom_call.1']
    #allocation7 [shape = 'u8[262144]{0}', space=vmem, size = 0x40000, scoped, tag = 'input window, operand 2']
    #allocation8 [shape = 'u8[65536]{0}', space=vmem, size = 0x10000, scoped, tag = 'input window, operand 4, single buffered']
    #allocation9 [shape = 's32[1]{0}', space=sflag, size = 0x4, scoped, tag = 'scoped memory for tpu_custom_call.1']
    #allocation10 [shape = 'u8[65536]{0}', space=vmem, size = 0x10000, scoped, tag = 'input window, operand 7, single buffered']
    #allocation11 [shape = 'u8[65536]{0}', space=vmem, size = 0x10000, scoped, tag = 'output window, operand 0']
    %14 = vsyncpa [#allocation3], 0
    %s15 = scalar_lea.sflag [#allocation3], 1
    %16 = vsyncpa %s15, 0
    %17 = vsyncpa [#allocation6], 0
    %s18 = scalar_lea.sflag [#allocation6], 1
    %19 = vsyncpa %s18, 0
    %20 = vsyncpa [#allocation9], 0
    %21 = vsyncpa [#allocation4], 0
    %s22 = scalar_lea.sflag [#allocation4], 1
    %23 = vsyncpa %s22, 0
    loop: start=0, step=1, limit=4
    $region2: #{tpu_custom_call.1} parent=1 // loop_pre_header
      _
    $region3: #{tpu_custom_call.1} parent=1 // loop_header
      %s25 = sphi 0, %s29
      %p26 = scmp.ge.s32.totalorder %s25, 4
      %s32 = sphi 0, %s44
      %s33 = sphi 0, %s40
      %s34 = sphi 0, %s32
      %s35 = sphi 0, %s33
      %s36 = sphi 0, %s34
      %s37 = sphi 0, %s35
      %s49 = sphi 0, %s51
      %s52 = sphi 0, %s49
      %s53 = sphi 0, %s52
      %s69 = sphi 0, %s53
      %s75 = sphi 0, %s77
      %s78 = sphi 0, %s75
      %s79 = sphi 0, %s78
      %s95 = sphi 0, %s79
      %s101 = sphi 0, %s103
      %s104 = sphi 0, %s101
      %s105 = sphi 0, %s104
      %s121 = sphi 0, %s105
      %s127 = sphi 0, %s129
      %s130 = sphi 0, %s127
      %s131 = sphi 0, %s130
      %s147 = sphi 0, %s131
      %s151 = sphi 0, %s151
      %s153 = sphi 0, %s151
      %s154 = sphi 0, %s153
      %s168 = sphi 0, %s154
      %s172 = sphi 0, %s172
      %s174 = sphi 0, %s172
      %s175 = sphi 0, %s174
      %s189 = sphi 0, %s175
      %s193 = sphi 0, %s193
      %s195 = sphi 0, %s193
      %s196 = sphi 0, %s195
      %s210 = sphi 0, %s196
      %s214 = sphi 0, %s214
      %s216 = sphi 0, %s214
      %s217 = sphi 0, %s216
      %s231 = sphi 0, %s217
      %s235 = sphi 0, %s235
      %s237 = sphi 0, %s235
      %s238 = sphi 0, %s237
      %s252 = sphi 0, %s238
      %s260 = sphi 0, %s262
      %s263 = sphi 0, %s260
      %s264 = sphi 0, %s263
      %s280 = sphi 0, %s264
    $region4: #{tpu_custom_call.1} parent=1 // loop_header_branch
      %28 = sbr.rel (%p26) target = $region8
    $region5: #{tpu_custom_call.1} parent=1 // loop_body
      %s30 = ssub.s32 %s25, 1
      %s31 = ssub.s32 %s25, 2
      %s38 = sadd.s32 1, %s33
      %p39 = scmp.ge.s32.totalorder %s38, 1
      %s40 = scalar_select %p39, 0, %s38
      %s41 = sadd.s32 1, %s32
      %s42 = scalar_select %p39, %s41, %s32
      %p43 = scmp.ge.s32.totalorder %s42, 2
      %s44 = scalar_select %p43, 0, %s42
      %s45 = ssub.s32 %s32, %s44
      %s46 = ssub.s32 %s33, %s40
      %s47 = sor.u32 %s45, %s46
      %p48 = scmp.eq.s32.totalorder %s47, 0
      %s50 = sadd.s32 %s49, 1
      %s51 = scalar_select %p48, %s49, %s50
      %p54 = pneg %p48
      %p55 = scmp.eq.s32.totalorder %s25, 1
      %p56 = por %p54, %p55
      %p57 = scmp.ne.s32.totalorder %s49, %s52
      %p58 = scmp.eq.s32.totalorder %s25, 0
      %p59 = por %p57, %p58
      %p60 = scmp.ne.s32.totalorder %s49, %s52
      %p61 = scmp.eq.s32.totalorder %s30, 1
      %p62 = por %p60, %p61
      %p63 = scmp.ne.s32.totalorder %s52, %s53
      %p64 = scmp.eq.s32.totalorder %s30, 0
      %p65 = por %p63, %p64
      %p66 = scmp.ne.s32.totalorder %s52, %s53
      %p67 = scmp.eq.s32.totalorder %s31, 1
      %p68 = por %p66, %p67
      %p70 = scmp.ne.s32.totalorder %s53, %s69
      %p71 = scmp.eq.s32.totalorder %s31, 0
      %p72 = por %p70, %p71
      %s73 = ssub.s32 %s32, %s44
      %p74 = scmp.eq.s32.totalorder %s73, 0
      %s76 = sadd.s32 %s75, 1
      %s77 = scalar_select %p74, %s75, %s76
      %p80 = pneg %p74
      %p81 = scmp.eq.s32.totalorder %s25, 1
      %p82 = por %p80, %p81
      %p83 = scmp.ne.s32.totalorder %s75, %s78
      %p84 = scmp.eq.s32.totalorder %s25, 0
      %p85 = por %p83, %p84
      %p86 = scmp.ne.s32.totalorder %s75, %s78
      %p87 = scmp.eq.s32.totalorder %s30, 1
      %p88 = por %p86, %p87
      %p89 = scmp.ne.s32.totalorder %s78, %s79
      %p90 = scmp.eq.s32.totalorder %s30, 0
      %p91 = por %p89, %p90
      %p92 = scmp.ne.s32.totalorder %s78, %s79
      %p93 = scmp.eq.s32.totalorder %s31, 1
      %p94 = por %p92, %p93
      %p96 = scmp.ne.s32.totalorder %s79, %s95
      %p97 = scmp.eq.s32.totalorder %s31, 0
      %p98 = por %p96, %p97
      %s99 = ssub.s32 %s32, %s44
      %p100 = scmp.eq.s32.totalorder %s99, 0
      %s102 = sadd.s32 %s101, 1
      %s103 = scalar_select %p100, %s101, %s102
      %p106 = pneg %p100
      %p107 = scmp.eq.s32.totalorder %s25, 1
      %p108 = por %p106, %p107
      %p109 = scmp.ne.s32.totalorder %s101, %s104
      %p110 = scmp.eq.s32.totalorder %s25, 0
      %p111 = por %p109, %p110
      %p112 = scmp.ne.s32.totalorder %s101, %s104
      %p113 = scmp.eq.s32.totalorder %s30, 1
      %p114 = por %p112, %p113
      %p115 = scmp.ne.s32.totalorder %s104, %s105
      %p116 = scmp.eq.s32.totalorder %s30, 0
      %p117 = por %p115, %p116
      %p118 = scmp.ne.s32.totalorder %s104, %s105
      %p119 = scmp.eq.s32.totalorder %s31, 1
      %p120 = por %p118, %p119
      %p122 = scmp.ne.s32.totalorder %s105, %s121
      %p123 = scmp.eq.s32.totalorder %s31, 0
      %p124 = por %p122, %p123
      %s125 = ssub.s32 %s32, %s44
      %p126 = scmp.eq.s32.totalorder %s125, 0
      %s128 = sadd.s32 %s127, 1
      %s129 = scalar_select %p126, %s127, %s128
      %p132 = pneg %p126
      %p133 = scmp.eq.s32.totalorder %s25, 1
      %p134 = por %p132, %p133
      %p135 = scmp.ne.s32.totalorder %s127, %s130
      %p136 = scmp.eq.s32.totalorder %s25, 0
      %p137 = por %p135, %p136
      %p138 = scmp.ne.s32.totalorder %s127, %s130
      %p139 = scmp.eq.s32.totalorder %s30, 1
      %p140 = por %p138, %p139
      %p141 = scmp.ne.s32.totalorder %s130, %s131
      %p142 = scmp.eq.s32.totalorder %s30, 0
      %p143 = por %p141, %p142
      %p144 = scmp.ne.s32.totalorder %s130, %s131
      %p145 = scmp.eq.s32.totalorder %s31, 1
      %p146 = por %p144, %p145
      %p148 = scmp.ne.s32.totalorder %s131, %s147
      %p149 = scmp.eq.s32.totalorder %s31, 0
      %p150 = por %p148, %p149
      %s152 = sadd.s32 %s151, 1
      %p155 = scmp.eq.s32.totalorder %s25, 1
      %p156 = scmp.ne.s32.totalorder %s151, %s153
      %p157 = scmp.eq.s32.totalorder %s25, 0
      %p158 = por %p156, %p157
      %p159 = scmp.ne.s32.totalorder %s151, %s153
      %p160 = scmp.eq.s32.totalorder %s30, 1
      %p161 = por %p159, %p160
      %p162 = scmp.ne.s32.totalorder %s153, %s154
      %p163 = scmp.eq.s32.totalorder %s30, 0
      %p164 = por %p162, %p163
      %p165 = scmp.ne.s32.totalorder %s153, %s154
      %p166 = scmp.eq.s32.totalorder %s31, 1
      %p167 = por %p165, %p166
      %p169 = scmp.ne.s32.totalorder %s154, %s168
      %p170 = scmp.eq.s32.totalorder %s31, 0
      %p171 = por %p169, %p170
      %s173 = sadd.s32 %s172, 1
      %p176 = scmp.eq.s32.totalorder %s25, 1
      %p177 = scmp.ne.s32.totalorder %s172, %s174
      %p178 = scmp.eq.s32.totalorder %s25, 0
      %p179 = por %p177, %p178
      %p180 = scmp.ne.s32.totalorder %s172, %s174
      %p181 = scmp.eq.s32.totalorder %s30, 1
      %p182 = por %p180, %p181
      %p183 = scmp.ne.s32.totalorder %s174, %s175
      %p184 = scmp.eq.s32.totalorder %s30, 0
      %p185 = por %p183, %p184
      %p186 = scmp.ne.s32.totalorder %s174, %s175
      %p187 = scmp.eq.s32.totalorder %s31, 1
      %p188 = por %p186, %p187
      %p190 = scmp.ne.s32.totalorder %s175, %s189
      %p191 = scmp.eq.s32.totalorder %s31, 0
      %p192 = por %p190, %p191
      %s194 = sadd.s32 %s193, 1
      %p197 = scmp.eq.s32.totalorder %s25, 1
      %p198 = scmp.ne.s32.totalorder %s193, %s195
      %p199 = scmp.eq.s32.totalorder %s25, 0
      %p200 = por %p198, %p199
      %p201 = scmp.ne.s32.totalorder %s193, %s195
      %p202 = scmp.eq.s32.totalorder %s30, 1
      %p203 = por %p201, %p202
      %p204 = scmp.ne.s32.totalorder %s195, %s196
      %p205 = scmp.eq.s32.totalorder %s30, 0
      %p206 = por %p204, %p205
      %p207 = scmp.ne.s32.totalorder %s195, %s196
      %p208 = scmp.eq.s32.totalorder %s31, 1
      %p209 = por %p207, %p208
      %p211 = scmp.ne.s32.totalorder %s196, %s210
      %p212 = scmp.eq.s32.totalorder %s31, 0
      %p213 = por %p211, %p212
      %s215 = sadd.s32 %s214, 1
      %p218 = scmp.eq.s32.totalorder %s25, 1
      %p219 = scmp.ne.s32.totalorder %s214, %s216
      %p220 = scmp.eq.s32.totalorder %s25, 0
      %p221 = por %p219, %p220
      %p222 = scmp.ne.s32.totalorder %s214, %s216
      %p223 = scmp.eq.s32.totalorder %s30, 1
      %p224 = por %p222, %p223
      %p225 = scmp.ne.s32.totalorder %s216, %s217
      %p226 = scmp.eq.s32.totalorder %s30, 0
      %p227 = por %p225, %p226
      %p228 = scmp.ne.s32.totalorder %s216, %s217
      %p229 = scmp.eq.s32.totalorder %s31, 1
      %p230 = por %p228, %p229
      %p232 = scmp.ne.s32.totalorder %s217, %s231
      %p233 = scmp.eq.s32.totalorder %s31, 0
      %p234 = por %p232, %p233
      %s236 = sadd.s32 %s235, 1
      %p239 = scmp.eq.s32.totalorder %s25, 1
      %p240 = scmp.ne.s32.totalorder %s235, %s237
      %p241 = scmp.eq.s32.totalorder %s25, 0
      %p242 = por %p240, %p241
      %p243 = scmp.ne.s32.totalorder %s235, %s237
      %p244 = scmp.eq.s32.totalorder %s30, 1
      %p245 = por %p243, %p244
      %p246 = scmp.ne.s32.totalorder %s237, %s238
      %p247 = scmp.eq.s32.totalorder %s30, 0
      %p248 = por %p246, %p247
      %p249 = scmp.ne.s32.totalorder %s237, %s238
      %p250 = scmp.eq.s32.totalorder %s31, 1
      %p251 = por %p249, %p250
      %p253 = scmp.ne.s32.totalorder %s238, %s252
      %p254 = scmp.eq.s32.totalorder %s31, 0
      %p255 = por %p253, %p254
      %s256 = ssub.s32 %s32, %s44
      %s257 = ssub.s32 %s33, %s40
      %s258 = sor.u32 %s256, %s257
      %p259 = scmp.eq.s32.totalorder %s258, 0
      %s261 = sadd.s32 %s260, 1
      %s262 = scalar_select %p259, %s260, %s261
      %p265 = pneg %p259
      %p266 = scmp.eq.s32.totalorder %s25, 1
      %p267 = por %p265, %p266
      %p268 = scmp.ne.s32.totalorder %s260, %s263
      %p269 = scmp.eq.s32.totalorder %s25, 0
      %p270 = por %p268, %p269
      %p271 = scmp.ne.s32.totalorder %s260, %s263
      %p272 = scmp.eq.s32.totalorder %s30, 1
      %p273 = por %p271, %p272
      %p274 = scmp.ne.s32.totalorder %s263, %s264
      %p275 = scmp.eq.s32.totalorder %s30, 0
      %p276 = por %p274, %p275
      %p277 = scmp.ne.s32.totalorder %s263, %s264
      %p278 = scmp.eq.s32.totalorder %s31, 1
      %p279 = por %p277, %p278
      %p281 = scmp.ne.s32.totalorder %s264, %s280
      %p282 = scmp.eq.s32.totalorder %s31, 0
      %p283 = por %p281, %p282
      %p284 = scmp.le.s32.totalorder 1, %s25
      %p285 = scmp.lt.s32.totalorder %s25, 3
      %p286 = pnand %p284, %p285
      %p287 = pneg %p286
      // Predicated region
      $region9: #{tpu_custom_call.1} parent=5 // pred_check
        _
      $region10: #{tpu_custom_call.1} parent=5 // pred_check_branch
        %289 = sbr.rel (%p286) target = $region12
      $region11: #{tpu_custom_call.1} parent=5 // pred_region
        %s290 = ssub.s32 %s25, 1
        // Predicated region
        $region13: #{tpu_custom_call.1} parent=11 // pred_check
          %p291 = pneg %p164
        $region14: #{tpu_custom_call.1} parent=11 // pred_check_branch
          %293 = sbr.rel (%p291) target = $region16
        $region15: #{tpu_custom_call.1} parent=11 // pred_region
          %s295 = ssub.s32 2048, 2048
          %296 = vsyncadd [#allocation9], %s295
          %s297 = sshll.u32 [#allocation8], 4
          %s298 = int_to_ptr.vmem [resolvable:$true] %s297
          %303 = dma.hbm_to_vmem [thread:$0]  %s4, 2048, %s298, [#allocation9], 128, 128, 8
        $region16: #{tpu_custom_call.1} parent=11 // pred_fallthru
          _
        // Predicated region
        $region17: #{tpu_custom_call.1} parent=11 // pred_check
          %p304 = pneg %p185
        $region18: #{tpu_custom_call.1} parent=11 // pred_check_branch
          %306 = sbr.rel (%p304) target = $region20
        $region19: #{tpu_custom_call.1} parent=11 // pred_region
          _
        $region20: #{tpu_custom_call.1} parent=11 // pred_fallthru
          _
        // Predicated region
        $region21: #{tpu_custom_call.1} parent=11 // pred_check
          %p307 = pneg %p206
        $region22: #{tpu_custom_call.1} parent=11 // pred_check_branch
          %309 = sbr.rel (%p307) target = $region24
        $region23: #{tpu_custom_call.1} parent=11 // pred_region
          _
        $region24: #{tpu_custom_call.1} parent=11 // pred_fallthru
          _
        // Predicated region
        $region25: #{tpu_custom_call.1} parent=11 // pred_check
          %p310 = pneg %p227
        $region26: #{tpu_custom_call.1} parent=11 // pred_check_branch
          %312 = sbr.rel (%p310) target = $region28
        $region27: #{tpu_custom_call.1} parent=11 // pred_region
          %s314 = ssub.s32 2048, 2048
          %315 = vsyncadd [#allocation9], %s314
          %s316 = sshll.u32 [#allocation10], 4
          %s317 = int_to_ptr.vmem [resolvable:$true] %s316
          %322 = dma.hbm_to_vmem [thread:$0]  %s7, 2048, %s317, [#allocation9], 128, 128, 8
        $region28: #{tpu_custom_call.1} parent=11 // pred_fallthru
          _
        // Predicated region
        $region29: #{tpu_custom_call.1} parent=11 // pred_check
          %p323 = pneg %p248
        $region30: #{tpu_custom_call.1} parent=11 // pred_check_branch
          %325 = sbr.rel (%p323) target = $region32
        $region31: #{tpu_custom_call.1} parent=11 // pred_region
          _
        $region32: #{tpu_custom_call.1} parent=11 // pred_fallthru
          _
      $region12: #{tpu_custom_call.1} parent=5 // pred_fallthru
        _
      %p326 = scmp.lt.s32.totalorder %s25, 2
      // Predicated region
      $region33: #{tpu_custom_call.1} parent=5 // pred_check
        %p327 = pneg %p326
      $region34: #{tpu_custom_call.1} parent=5 // pred_check_branch
        %329 = sbr.rel (%p327) target = $region36
      $region35: #{tpu_custom_call.1} parent=5 // pred_region
        // Predicated region
        $region37: #{tpu_custom_call.1} parent=35 // pred_check
          %p330 = pneg %p59
        $region38: #{tpu_custom_call.1} parent=35 // pred_check_branch
          %332 = sbr.rel (%p330) target = $region40
        $region39: #{tpu_custom_call.1} parent=35 // pred_region
          %s333 = sand.u32 %s49, 1
          %s334 = scalar_lea.sflag [#allocation3], %s333
          %s335 = sand.u32 %s49, 1
          %s336 = smul.addr %s335, 64
          %s337 = scalar_lea.vmem [#allocation2], %s336
          %s338 = smul.u32 8, %s33
          %s340 = ssub.s32 1024, 1024
          %341 = vsyncadd %s334, %s340
          %s342 = smul.addr %s32, 8
          %s343 = sadd.s32 %s338, %s342
          %s344 = smul.addr %s343, 128
          %s345 = scalar_lea.hbm %s0, %s344
          %s346 = sshll.u32 %s337, 4
          %s347 = int_to_ptr.vmem [resolvable:$true] %s346
          %352 = dma.hbm_to_vmem [thread:$0]  %s345, 1024, %s347, %s334, 128, 128, 8
        $region40: #{tpu_custom_call.1} parent=35 // pred_fallthru
          _
        // Predicated region
        $region41: #{tpu_custom_call.1} parent=35 // pred_check
          %p353 = pneg %p85
        $region42: #{tpu_custom_call.1} parent=35 // pred_check_branch
          %355 = sbr.rel (%p353) target = $region44
        $region43: #{tpu_custom_call.1} parent=35 // pred_region
          %s356 = sand.u32 %s25, 1
          %s357 = scalar_lea.sflag [#allocation6], %s356
          %s358 = sand.u32 %s75, 1
          %s359 = smul.addr %s358, 128
          %s360 = scalar_lea.vmem [#allocation5], %s359
          %s362 = ssub.s32 2048, 2048
          %363 = vsyncadd %s357, %s362
          %s364 = smul.addr %s32, 16
          %s365 = smul.addr %s364, 128
          %s366 = scalar_lea.hbm %s1, %s365
          %s367 = sshll.u32 %s360, 4
          %s368 = int_to_ptr.vmem [resolvable:$true] %s367
          %373 = dma.hbm_to_vmem [thread:$0]  %s366, 2048, %s368, %s357, 128, 128, 8
        $region44: #{tpu_custom_call.1} parent=35 // pred_fallthru
          _
        // Predicated region
        $region45: #{tpu_custom_call.1} parent=35 // pred_check
          %p374 = pneg %p111
        $region46: #{tpu_custom_call.1} parent=35 // pred_check_branch
          %376 = sbr.rel (%p374) target = $region48
        $region47: #{tpu_custom_call.1} parent=35 // pred_region
          %s377 = sand.u32 %s25, 1
          %s378 = scalar_lea.sflag [#allocation6], %s377
          %s379 = sand.u32 %s101, 1
          %s380 = smul.addr %s379, 256
          %s381 = scalar_lea.vmem [#allocation7], %s380
          %s383 = ssub.s32 4096, 4096
          %384 = vsyncadd %s378, %s383
          %s385 = smul.addr %s32, 32
          %s386 = smul.addr %s385, 128
          %s387 = scalar_lea.hbm %s2, %s386
          %s388 = sshll.u32 %s381, 4
          %s389 = int_to_ptr.vmem [resolvable:$true] %s388
          %394 = dma.hbm_to_vmem [thread:$0]  %s387, 4096, %s389, %s378, 128, 128, 8
        $region48: #{tpu_custom_call.1} parent=35 // pred_fallthru
          _
        // Predicated region
        $region49: #{tpu_custom_call.1} parent=35 // pred_check
          %p395 = pneg %p137
        $region50: #{tpu_custom_call.1} parent=35 // pred_check_branch
          %397 = sbr.rel (%p395) target = $region52
        $region51: #{tpu_custom_call.1} parent=35 // pred_region
          %p398 = scmp.lt.s32.totalorder %s32, 1
          %s399 = scalar_select %p398, %s32, 1
          %s400 = scalar_lea.vmem %s3, %s399
        $region52: #{tpu_custom_call.1} parent=35 // pred_fallthru
          _
      $region36: #{tpu_custom_call.1} parent=5 // pred_fallthru
        _
      %p401 = scmp.le.s32.totalorder 1, %s25
      %p402 = scmp.lt.s32.totalorder %s25, 3
      %p403 = pnand %p401, %p402
      %p404 = pneg %p403
      // Predicated region
      $region53: #{tpu_custom_call.1} parent=5 // pred_check
        _
      $region54: #{tpu_custom_call.1} parent=5 // pred_check_branch
        %406 = sbr.rel (%p403) target = $region56
      $region55: #{tpu_custom_call.1} parent=5 // pred_region
        %s407 = ssub.s32 %s25, 1
        %s408 = sand.u32 %s52, 1
        %s409 = scalar_lea.sflag [#allocation3], %s408
        %s410 = sand.u32 %s52, 1
        %s411 = smul.addr %s410, 64
        %s412 = scalar_lea.vmem [#allocation2], %s411
        // Predicated region
        $region57: #{tpu_custom_call.1} parent=55 // pred_check
          %p413 = pneg %p65
        $region58: #{tpu_custom_call.1} parent=55 // pred_check_branch
          %415 = sbr.rel (%p413) target = $region60
        $region59: #{tpu_custom_call.1} parent=55 // pred_region
          %416 = dma.done %s409, 1024
        $region60: #{tpu_custom_call.1} parent=55 // pred_fallthru
          _
        %s417 = sand.u32 %s30, 1
        %s418 = scalar_lea.sflag [#allocation6], %s417
        %s419 = sand.u32 %s78, 1
        %s420 = smul.addr %s419, 128
        %s421 = scalar_lea.vmem [#allocation5], %s420
        // Predicated region
        $region61: #{tpu_custom_call.1} parent=55 // pred_check
          %p422 = pneg %p91
        $region62: #{tpu_custom_call.1} parent=55 // pred_check_branch
          %424 = sbr.rel (%p422) target = $region64
        $region63: #{tpu_custom_call.1} parent=55 // pred_region
          %425 = dma.done %s418, 2048
        $region64: #{tpu_custom_call.1} parent=55 // pred_fallthru
          _
        %s426 = sand.u32 %s30, 1
        %s427 = scalar_lea.sflag [#allocation6], %s426
        %s428 = sand.u32 %s104, 1
        %s429 = smul.addr %s428, 256
        %s430 = scalar_lea.vmem [#allocation7], %s429
        // Predicated region
        $region65: #{tpu_custom_call.1} parent=55 // pred_check
          %p431 = pneg %p117
        $region66: #{tpu_custom_call.1} parent=55 // pred_check_branch
          %433 = sbr.rel (%p431) target = $region68
        $region67: #{tpu_custom_call.1} parent=55 // pred_region
          %434 = dma.done %s427, 4096
        $region68: #{tpu_custom_call.1} parent=55 // pred_fallthru
          _
        // Predicated region
        $region69: #{tpu_custom_call.1} parent=55 // pred_check
          %p435 = pneg %p164
        $region70: #{tpu_custom_call.1} parent=55 // pred_check_branch
          %437 = sbr.rel (%p435) target = $region72
        $region71: #{tpu_custom_call.1} parent=55 // pred_region
          %438 = dma.done [#allocation9], 2048
        $region72: #{tpu_custom_call.1} parent=55 // pred_fallthru
          _
        // Predicated region
        $region73: #{tpu_custom_call.1} parent=55 // pred_check
          %p439 = pneg %p227
        $region74: #{tpu_custom_call.1} parent=55 // pred_check_branch
          %441 = sbr.rel (%p439) target = $region76
        $region75: #{tpu_custom_call.1} parent=55 // pred_region
          %442 = dma.done [#allocation9], 2048
        $region76: #{tpu_custom_call.1} parent=55 // pred_fallthru
          _
        %s443 = sand.u32 %s52, 1
        %s444 = scalar_lea.sflag [#allocation3], %s443
        %s445 = sand.u32 %s52, 1
        %s446 = smul.addr %s445, 64
        %s447 = scalar_lea.vmem [#allocation2], %s446
        %p448 = pneg %p65
        %p449 = pneg %p62
        %s450 = sand.u32 %s30, 1
        %s451 = scalar_lea.sflag [#allocation6], %s450
        %s452 = sand.u32 %s78, 1
        %s453 = smul.addr %s452, 128
        %s454 = scalar_lea.vmem [#allocation5], %s453
        %p455 = pneg %p91
        %p456 = pneg %p88
        %s457 = sand.u32 %s30, 1
        %s458 = scalar_lea.sflag [#allocation6], %s457
        %s459 = sand.u32 %s104, 1
        %s460 = smul.addr %s459, 256
        %s461 = scalar_lea.vmem [#allocation7], %s460
        %p462 = pneg %p117
        %p463 = pneg %p114
        %p464 = scmp.lt.s32.totalorder %s34, 1
        %s465 = scalar_select %p464, %s34, 1
        %s466 = scalar_lea.vmem %s3, %s465
        %p467 = pneg %p143
        %p468 = pneg %p140
        %p469 = pneg %p164
        %p470 = pneg %p161
        %p471 = pneg %p185
        %p472 = pneg %p182
        %p473 = pneg %p206
        %p474 = pneg %p203
        %p475 = pneg %p227
        %p476 = pneg %p224
        %p477 = pneg %p248
        %p478 = pneg %p245
        %p479 = pneg %p276
        %p480 = pneg %p273
        %s481 = sand.u32 %s263, 1
        %s482 = scalar_lea.sflag [#allocation4], %s481
        %s483 = sand.u32 %s263, 1
        %s484 = smul.addr %s483, 64
        %s485 = scalar_lea.vmem [#allocation11], %s484
        %s486 = smul.u32 8, %s35
        %p487 = scmp.lt.s32.totalorder %s34, 1
        %s488 = scalar_select %p487, %s34, 1
        %s489 = scalar_lea.vmem %s3, %s488
        %s490 = smul.u32 8, %s35
        %v491 = vld [vmem:[%s412] sm:$0xff]
        %v492 = vld [vmem:[%s412 + $0x8] sm:$0xff]
        %v493 = vld [vmem:[%s412 + $0x10] sm:$0xff]
        %v494 = vld [vmem:[%s412 + $0x18] sm:$0xff]
        %v495 = vld [vmem:[%s412 + $0x20] sm:$0xff]
        %v496 = vld [vmem:[%s412 + $0x28] sm:$0xff]
        %v497 = vld [vmem:[%s412 + $0x30] sm:$0xff]
        %v498 = vld [vmem:[%s412 + $0x38] sm:$0xff]
        %v499 = vld [vmem:[#allocation8] sm:$0xff]
        %v500 = vld [vmem:[#allocation8 + $0x8] sm:$0xff]
        %v501 = vld [vmem:[#allocation8 + $0x10] sm:$0xff]
        %v502 = vld [vmem:[#allocation8 + $0x18] sm:$0xff]
        %v503 = vld [vmem:[#allocation8 + $0x20] sm:$0xff]
        %v504 = vld [vmem:[#allocation8 + $0x28] sm:$0xff]
        %v505 = vld [vmem:[#allocation8 + $0x30] sm:$0xff]
        %v506 = vld [vmem:[#allocation8 + $0x38] sm:$0xff]
        %v507 = vld [vmem:[#allocation8 + $0x40] sm:$0xff]
        %v508 = vld [vmem:[#allocation8 + $0x48] sm:$0xff]
        %v509 = vld [vmem:[#allocation8 + $0x50] sm:$0xff]
        %v510 = vld [vmem:[#allocation8 + $0x58] sm:$0xff]
        %v511 = vld [vmem:[#allocation8 + $0x60] sm:$0xff]
        %v512 = vld [vmem:[#allocation8 + $0x68] sm:$0xff]
        %v513 = vld [vmem:[#allocation8 + $0x70] sm:$0xff]
        %v514 = vld [vmem:[#allocation8 + $0x78] sm:$0xff]
        %v515 = vld [vmem:[%s5] sm:$0x1]
        %v517 = vlaneseq
        %v518 = vshrl.u32 %v517, 7
        %v519 = vsub.s32 0, %v518
        %v520 = vrot.slane %v515, %v519
        %522 = vmatprep.subr.mxu0 0.0
        %523 = vmatpush1.msra.mxu0 %v499
        %524 = vmatprep.subr.mxu0 0.0
        %525 = vmatpush1.msra.mxu0 %v500
        %526 = vmatprep.subr.mxu0 0.0
        %527 = vmatpush1.msra.mxu0 %v501
        %528 = vmatprep.subr.mxu0 0.0
        %529 = vmatpush1.msra.mxu0 %v502
        %530 = vmatprep.subr.mxu0 0.0
        %531 = vmatpush1.msra.mxu0 %v503
        %532 = vmatprep.subr.mxu0 0.0
        %533 = vmatpush1.msra.mxu0 %v504
        %534 = vmatprep.subr.mxu0 0.0
        %535 = vmatpush1.msra.mxu0 %v505
        %536 = vmatprep.subr.mxu0 0.0
        %537 = vmatpush1.msra.mxu0 %v506
        %538 = vmatprep.subr.mxu0 0.0
        %539 = vmatpush1.msra.mxu0 %v507
        %540 = vmatprep.subr.mxu0 0.0
        %541 = vmatpush1.msra.mxu0 %v508
        %542 = vmatprep.subr.mxu0 0.0
        %543 = vmatpush1.msra.mxu0 %v509
        %544 = vmatprep.subr.mxu0 0.0
        %545 = vmatpush1.msra.mxu0 %v510
        %546 = vmatprep.subr.mxu0 0.0
        %547 = vmatpush1.msra.mxu0 %v511
        %548 = vmatprep.subr.mxu0 0.0
        %549 = vmatpush1.msra.mxu0 %v512
        %550 = vmatprep.subr.mxu0 0.0
        %551 = vmatpush1.msra.mxu0 %v513
        %552 = vmatprep.subr.mxu0 0.0
        %553 = vmatpush1.msra.mxu0 %v514
        %554 = vmatprep.subr.mxu0 0.0
        %555 = vmatpush1.msra.mxu0 0.0
        %556 = vmatprep.subr.mxu0 0.0
        %557 = vmatpush1.msra.mxu0 0.0
        %558 = vmatprep.subr.mxu0 0.0
        %559 = vmatpush1.msra.mxu0 0.0
        %560 = vmatprep.subr.mxu0 0.0
        %561 = vmatpush1.msra.mxu0 0.0
        %562 = vmatprep.subr.mxu0 0.0
        %563 = vmatpush1.msra.mxu0 0.0
        %564 = vmatprep.subr.mxu0 0.0
        %565 = vmatpush1.msra.mxu0 0.0
        %566 = vmatprep.subr.mxu0 0.0
        %567 = vmatpush1.msra.mxu0 0.0
        %568 = vmatprep.subr.mxu0 0.0
        %569 = vmatpush1.msra.mxu0 0.0
        %570 = vmatprep.subr.mxu0 0.0
        %571 = vmatpush1.msra.mxu0 0.0
        %572 = vmatprep.subr.mxu0 0.0
        %573 = vmatpush1.msra.mxu0 0.0
        %574 = vmatprep.subr.mxu0 0.0
        %575 = vmatpush1.msra.mxu0 0.0
        %576 = vmatprep.subr.mxu0 0.0
        %577 = vmatpush1.msra.mxu0 0.0
        %578 = vmatprep.subr.mxu0 0.0
        %579 = vmatpush1.msra.mxu0 0.0
        %580 = vmatprep.subr.mxu0 0.0
        %581 = vmatpush1.msra.mxu0 0.0
        %582 = vmatprep.subr.mxu0 0.0
        %583 = vmatpush1.msra.mxu0 0.0
        %584 = vmatprep.subr.mxu0 0.0
        %585 = vmatpush1.msra.mxu0 0.0
        %586 = vmatprep.mubr.f32.mxu0 0.0
        %587 = vmatmul.mubr.f32.gmra.mrb[0].mxu0 %v491
        %v588 = vpop.f32.mrb[0].mxu0
        %v589 = vadd.f32 %v520, %v588
        %v590 = vpop.f32.mrb[0].mxu0
        %591 = vmatprep.mubr.f32.mxu0 0.0
        %592 = vmatmul.mubr.f32.gmra.mrb[0].mxu0 %v492
        %v593 = vpop.f32.mrb[0].mxu0
        %v594 = vadd.f32 %v520, %v593
        %v595 = vpop.f32.mrb[0].mxu0
        %596 = vmatprep.mubr.f32.mxu0 0.0
        %597 = vmatmul.mubr.f32.gmra.mrb[0].mxu0 %v493
        %v598 = vpop.f32.mrb[0].mxu0
        %v599 = vadd.f32 %v520, %v598
        %v600 = vpop.f32.mrb[0].mxu0
        %601 = vmatprep.mubr.f32.mxu0 0.0
        %602 = vmatmul.mubr.f32.gmra.mrb[0].mxu0 %v494
        %v603 = vpop.f32.mrb[0].mxu0
        %v604 = vadd.f32 %v520, %v603
        %v605 = vpop.f32.mrb[0].mxu0
        %606 = vmatprep.mubr.f32.mxu0 0.0
        %607 = vmatmul.mubr.f32.gmra.mrb[0].mxu0 %v495
        %v608 = vpop.f32.mrb[0].mxu0
        %v609 = vadd.f32 %v520, %v608
        %v610 = vpop.f32.mrb[0].mxu0
        %611 = vmatprep.mubr.f32.mxu0 0.0
        %612 = vmatmul.mubr.f32.gmra.mrb[0].mxu0 %v496
        %v613 = vpop.f32.mrb[0].mxu0
        %v614 = vadd.f32 %v520, %v613
        %v615 = vpop.f32.mrb[0].mxu0
        %616 = vmatprep.mubr.f32.mxu0 0.0
        %617 = vmatmul.mubr.f32.gmra.mrb[0].mxu0 %v497
        %v618 = vpop.f32.mrb[0].mxu0
        %v619 = vadd.f32 %v520, %v618
        %v620 = vpop.f32.mrb[0].mxu0
        %621 = vmatprep.mubr.f32.mxu0 0.0
        %622 = vmatmul.mubr.f32.gmra.mrb[0].mxu0 %v498
        %v623 = vpop.f32.mrb[0].mxu0
        %v624 = vadd.f32 %v520, %v623
        %v625 = vpop.f32.mrb[0].mxu0
        %626 = vdwg.mxu0
        %v627 = vld [vmem:[%s421] sm:$0xff]
        %v628 = vld [vmem:[%s421 + $0x8] sm:$0xff]
        %v629 = vld [vmem:[%s421 + $0x10] sm:$0xff]
        %v630 = vld [vmem:[%s421 + $0x18] sm:$0xff]
        %v631 = vld [vmem:[%s421 + $0x20] sm:$0xff]
        %v632 = vld [vmem:[%s421 + $0x28] sm:$0xff]
        %v633 = vld [vmem:[%s421 + $0x30] sm:$0xff]
        %v634 = vld [vmem:[%s421 + $0x38] sm:$0xff]
        %v635 = vld [vmem:[%s421 + $0x40] sm:$0xff]
        %v636 = vld [vmem:[%s421 + $0x48] sm:$0xff]
        %v637 = vld [vmem:[%s421 + $0x50] sm:$0xff]
        %v638 = vld [vmem:[%s421 + $0x58] sm:$0xff]
        %v639 = vld [vmem:[%s421 + $0x60] sm:$0xff]
        %v640 = vld [vmem:[%s421 + $0x68] sm:$0xff]
        %v641 = vld [vmem:[%s421 + $0x70] sm:$0xff]
        %v642 = vld [vmem:[%s421 + $0x78] sm:$0xff]
        %v643 = vld [vmem:[%s489] sm:$0x1]
        %v645 = vlaneseq
        %v646 = vshrl.u32 %v645, 7
        %v647 = vsub.s32 0, %v646
        %v648 = vrot.slane %v643, %v647
        %650 = vmatprep.subr.mxu0 0.0
        %651 = vmatpush1.msra.mxu0 %v627
        %652 = vmatprep.subr.mxu0 0.0
        %653 = vmatpush1.msra.mxu0 %v628
        %654 = vmatprep.subr.mxu0 0.0
        %655 = vmatpush1.msra.mxu0 %v629
        %656 = vmatprep.subr.mxu0 0.0
        %657 = vmatpush1.msra.mxu0 %v630
        %658 = vmatprep.subr.mxu0 0.0
        %659 = vmatpush1.msra.mxu0 %v631
        %660 = vmatprep.subr.mxu0 0.0
        %661 = vmatpush1.msra.mxu0 %v632
        %662 = vmatprep.subr.mxu0 0.0
        %663 = vmatpush1.msra.mxu0 %v633
        %664 = vmatprep.subr.mxu0 0.0
        %665 = vmatpush1.msra.mxu0 %v634
        %666 = vmatprep.subr.mxu0 0.0
        %667 = vmatpush1.msra.mxu0 %v635
        %668 = vmatprep.subr.mxu0 0.0
        %669 = vmatpush1.msra.mxu0 %v636
        %670 = vmatprep.subr.mxu0 0.0
        %671 = vmatpush1.msra.mxu0 %v637
        %672 = vmatprep.subr.mxu0 0.0
        %673 = vmatpush1.msra.mxu0 %v638
        %674 = vmatprep.subr.mxu0 0.0
        %675 = vmatpush1.msra.mxu0 %v639
        %676 = vmatprep.subr.mxu0 0.0
        %677 = vmatpush1.msra.mxu0 %v640
        %678 = vmatprep.subr.mxu0 0.0
        %679 = vmatpush1.msra.mxu0 %v641
        %680 = vmatprep.subr.mxu0 0.0
        %681 = vmatpush1.msra.mxu0 %v642
        %682 = vmatprep.subr.mxu0 0.0
        %683 = vmatpush1.msra.mxu0 0.0
        %684 = vmatprep.subr.mxu0 0.0
        %685 = vmatpush1.msra.mxu0 0.0
        %686 = vmatprep.subr.mxu0 0.0
        %687 = vmatpush1.msra.mxu0 0.0
        %688 = vmatprep.subr.mxu0 0.0
        %689 = vmatpush1.msra.mxu0 0.0
        %690 = vmatprep.subr.mxu0 0.0
        %691 = vmatpush1.msra.mxu0 0.0
        %692 = vmatprep.subr.mxu0 0.0
        %693 = vmatpush1.msra.mxu0 0.0
        %694 = vmatprep.subr.mxu0 0.0
        %695 = vmatpush1.msra.mxu0 0.0
        %696 = vmatprep.subr.mxu0 0.0
        %697 = vmatpush1.msra.mxu0 0.0
        %698 = vmatprep.subr.mxu0 0.0
        %699 = vmatpush1.msra.mxu0 0.0
        %700 = vmatprep.subr.mxu0 0.0
        %701 = vmatpush1.msra.mxu0 0.0
        %702 = vmatprep.subr.mxu0 0.0
        %703 = vmatpush1.msra.mxu0 0.0
        %704 = vmatprep.subr.mxu0 0.0
        %705 = vmatpush1.msra.mxu0 0.0
        %706 = vmatprep.subr.mxu0 0.0
        %707 = vmatpush1.msra.mxu0 0.0
        %708 = vmatprep.subr.mxu0 0.0
        %709 = vmatpush1.msra.mxu0 0.0
        %710 = vmatprep.subr.mxu0 0.0
        %711 = vmatpush1.msra.mxu0 0.0
        %712 = vmatprep.subr.mxu0 0.0
        %713 = vmatpush1.msra.mxu0 0.0
        %714 = vmatprep.mubr.f32.mxu0 0.0
        %715 = vmatmul.mubr.f32.gmra.mrb[0].mxu0 %v589
        %v716 = vpop.f32.mrb[0].mxu0
        %v717 = vadd.f32 %v648, %v716
        %v718 = vpop.f32.mrb[0].mxu0
        %719 = vmatprep.mubr.f32.mxu0 0.0
        %720 = vmatmul.mubr.f32.gmra.mrb[0].mxu0 %v594
        %v721 = vpop.f32.mrb[0].mxu0
        %v722 = vadd.f32 %v648, %v721
        %v723 = vpop.f32.mrb[0].mxu0
        %724 = vmatprep.mubr.f32.mxu0 0.0
        %725 = vmatmul.mubr.f32.gmra.mrb[0].mxu0 %v599
        %v726 = vpop.f32.mrb[0].mxu0
        %v727 = vadd.f32 %v648, %v726
        %v728 = vpop.f32.mrb[0].mxu0
        %729 = vmatprep.mubr.f32.mxu0 0.0
        %730 = vmatmul.mubr.f32.gmra.mrb[0].mxu0 %v604
        %v731 = vpop.f32.mrb[0].mxu0
        %v732 = vadd.f32 %v648, %v731
        %v733 = vpop.f32.mrb[0].mxu0
        %734 = vmatprep.mubr.f32.mxu0 0.0
        %735 = vmatmul.mubr.f32.gmra.mrb[0].mxu0 %v609
        %v736 = vpop.f32.mrb[0].mxu0
        %v737 = vadd.f32 %v648, %v736
        %v738 = vpop.f32.mrb[0].mxu0
        %739 = vmatprep.mubr.f32.mxu0 0.0
        %740 = vmatmul.mubr.f32.gmra.mrb[0].mxu0 %v614
        %v741 = vpop.f32.mrb[0].mxu0
        %v742 = vadd.f32 %v648, %v741
        %v743 = vpop.f32.mrb[0].mxu0
        %744 = vmatprep.mubr.f32.mxu0 0.0
        %745 = vmatmul.mubr.f32.gmra.mrb[0].mxu0 %v619
        %v746 = vpop.f32.mrb[0].mxu0
        %v747 = vadd.f32 %v648, %v746
        %v748 = vpop.f32.mrb[0].mxu0
        %749 = vmatprep.mubr.f32.mxu0 0.0
        %750 = vmatmul.mubr.f32.gmra.mrb[0].mxu0 %v624
        %v751 = vpop.f32.mrb[0].mxu0
        %v752 = vadd.f32 %v648, %v751
        %v753 = vpop.f32.mrb[0].mxu0
        %754 = vdwg.mxu0
        %755 = vmax.xlane.f32.xlu0 %v717
        %v756 = vpop.xlane.xlu0 %755
        %757 = vmax.xlane.f32.xlu0 %v722
        %v758 = vpop.xlane.xlu0 %757
        %759 = vmax.xlane.f32.xlu0 %v727
        %v760 = vpop.xlane.xlu0 %759
        %761 = vmax.xlane.f32.xlu0 %v732
        %v762 = vpop.xlane.xlu0 %761
        %763 = vmax.xlane.f32.xlu0 %v737
        %v764 = vpop.xlane.xlu0 %763
        %765 = vmax.xlane.f32.xlu0 %v742
        %v766 = vpop.xlane.xlu0 %765
        %767 = vmax.xlane.f32.xlu0 %v747
        %v768 = vpop.xlane.xlu0 %767
        %769 = vmax.xlane.f32.xlu0 %v752
        %v770 = vpop.xlane.xlu0 %769
        %v771 = vsub.f32 %v717, %v756
        %v772 = vsub.f32 %v722, %v758
        %v773 = vsub.f32 %v727, %v760
        %v774 = vsub.f32 %v732, %v762
        %v775 = vsub.f32 %v737, %v764
        %v776 = vsub.f32 %v742, %v766
        %v777 = vsub.f32 %v747, %v768
        %v778 = vsub.f32 %v752, %v770
        %v779 = vmul.f32 %v771, 1.442695
        %v780 = vpow.pop %v779
        %v781 = vmul.f32 %v772, 1.442695
        %v782 = vpow.pop %v781
        %v783 = vmul.f32 %v773, 1.442695
        %v784 = vpow.pop %v783
        %v785 = vmul.f32 %v774, 1.442695
        %v786 = vpow.pop %v785
        %v787 = vmul.f32 %v775, 1.442695
        %v788 = vpow.pop %v787
        %v789 = vmul.f32 %v776, 1.442695
        %v790 = vpow.pop %v789
        %v791 = vmul.f32 %v777, 1.442695
        %v792 = vpow.pop %v791
        %v793 = vmul.f32 %v778, 1.442695
        %v794 = vpow.pop %v793
        %795 = vadd.xlane.f32.xlu0 %v780
        %v796 = vpop.xlane.xlu0 %795
        %797 = vadd.xlane.f32.xlu0 %v782
        %v798 = vpop.xlane.xlu0 %797
        %799 = vadd.xlane.f32.xlu0 %v784
        %v800 = vpop.xlane.xlu0 %799
        %801 = vadd.xlane.f32.xlu0 %v786
        %v802 = vpop.xlane.xlu0 %801
        %803 = vadd.xlane.f32.xlu0 %v788
        %v804 = vpop.xlane.xlu0 %803
        %805 = vadd.xlane.f32.xlu0 %v790
        %v806 = vpop.xlane.xlu0 %805
        %807 = vadd.xlane.f32.xlu0 %v792
        %v808 = vpop.xlane.xlu0 %807
        %809 = vadd.xlane.f32.xlu0 %v794
        %v810 = vpop.xlane.xlu0 %809
        %v811 = vrcp.pop %v796
        %v812 = vrcp.pop %v798
        %v813 = vrcp.pop %v800
        %v814 = vrcp.pop %v802
        %v815 = vrcp.pop %v804
        %v816 = vrcp.pop %v806
        %v817 = vrcp.pop %v808
        %v818 = vrcp.pop %v810
        %v819 = vmul.f32 %v780, %v811
        %v820 = vmul.f32 %v782, %v812
        %v821 = vmul.f32 %v784, %v813
        %v822 = vmul.f32 %v786, %v814
        %v823 = vmul.f32 %v788, %v815
        %v824 = vmul.f32 %v790, %v816
        %v825 = vmul.f32 %v792, %v817
        %v826 = vmul.f32 %v794, %v818
        %v827 = vld [vmem:[%s430] sm:$0xff]
        %v828 = vld [vmem:[%s430 + $0x8] sm:$0xff]
        %v829 = vld [vmem:[%s430 + $0x10] sm:$0xff]
        %v830 = vld [vmem:[%s430 + $0x18] sm:$0xff]
        %v831 = vld [vmem:[%s430 + $0x20] sm:$0xff]
        %v832 = vld [vmem:[%s430 + $0x28] sm:$0xff]
        %v833 = vld [vmem:[%s430 + $0x30] sm:$0xff]
        %v834 = vld [vmem:[%s430 + $0x38] sm:$0xff]
        %v835 = vld [vmem:[%s430 + $0x40] sm:$0xff]
        %v836 = vld [vmem:[%s430 + $0x48] sm:$0xff]
        %v837 = vld [vmem:[%s430 + $0x50] sm:$0xff]
        %v838 = vld [vmem:[%s430 + $0x58] sm:$0xff]
        %v839 = vld [vmem:[%s430 + $0x60] sm:$0xff]
        %v840 = vld [vmem:[%s430 + $0x68] sm:$0xff]
        %v841 = vld [vmem:[%s430 + $0x70] sm:$0xff]
        %v842 = vld [vmem:[%s430 + $0x78] sm:$0xff]
        %v843 = vld [vmem:[%s430 + $0x80] sm:$0xff]
        %v844 = vld [vmem:[%s430 + $0x88] sm:$0xff]
        %v845 = vld [vmem:[%s430 + $0x90] sm:$0xff]
        %v846 = vld [vmem:[%s430 + $0x98] sm:$0xff]
        %v847 = vld [vmem:[%s430 + $0xa0] sm:$0xff]
        %v848 = vld [vmem:[%s430 + $0xa8] sm:$0xff]
        %v849 = vld [vmem:[%s430 + $0xb0] sm:$0xff]
        %v850 = vld [vmem:[%s430 + $0xb8] sm:$0xff]
        %v851 = vld [vmem:[%s430 + $0xc0] sm:$0xff]
        %v852 = vld [vmem:[%s430 + $0xc8] sm:$0xff]
        %v853 = vld [vmem:[%s430 + $0xd0] sm:$0xff]
        %v854 = vld [vmem:[%s430 + $0xd8] sm:$0xff]
        %v855 = vld [vmem:[%s430 + $0xe0] sm:$0xff]
        %v856 = vld [vmem:[%s430 + $0xe8] sm:$0xff]
        %v857 = vld [vmem:[%s430 + $0xf0] sm:$0xff]
        %v858 = vld [vmem:[%s430 + $0xf8] sm:$0xff]
        %v859 = vld [vmem:[%s6] sm:$0x1]
        %v861 = vlaneseq
        %v862 = vshrl.u32 %v861, 7
        %v863 = vsub.s32 0, %v862
        %v864 = vrot.slane %v859, %v863
        %866 = vmatprep.subr.mxu0 0.0
        %867 = vmatpush1.msra.mxu0 %v827
        %868 = vmatprep.subr.mxu0 0.0
        %869 = vmatpush1.msra.mxu0 %v828
        %870 = vmatprep.subr.mxu0 0.0
        %871 = vmatpush1.msra.mxu0 %v829
        %872 = vmatprep.subr.mxu0 0.0
        %873 = vmatpush1.msra.mxu0 %v830
        %874 = vmatprep.subr.mxu0 0.0
        %875 = vmatpush1.msra.mxu0 %v831
        %876 = vmatprep.subr.mxu0 0.0
        %877 = vmatpush1.msra.mxu0 %v832
        %878 = vmatprep.subr.mxu0 0.0
        %879 = vmatpush1.msra.mxu0 %v833
        %880 = vmatprep.subr.mxu0 0.0
        %881 = vmatpush1.msra.mxu0 %v834
        %882 = vmatprep.subr.mxu0 0.0
        %883 = vmatpush1.msra.mxu0 %v835
        %884 = vmatprep.subr.mxu0 0.0
        %885 = vmatpush1.msra.mxu0 %v836
        %886 = vmatprep.subr.mxu0 0.0
        %887 = vmatpush1.msra.mxu0 %v837
        %888 = vmatprep.subr.mxu0 0.0
        %889 = vmatpush1.msra.mxu0 %v838
        %890 = vmatprep.subr.mxu0 0.0
        %891 = vmatpush1.msra.mxu0 %v839
        %892 = vmatprep.subr.mxu0 0.0
        %893 = vmatpush1.msra.mxu0 %v840
        %894 = vmatprep.subr.mxu0 0.0
        %895 = vmatpush1.msra.mxu0 %v841
        %896 = vmatprep.subr.mxu0 0.0
        %897 = vmatpush1.msra.mxu0 %v842
        %898 = vmatprep.subr.mxu0 0.0
        %899 = vmatpush1.msra.mxu0 %v843
        %900 = vmatprep.subr.mxu0 0.0
        %901 = vmatpush1.msra.mxu0 %v844
        %902 = vmatprep.subr.mxu0 0.0
        %903 = vmatpush1.msra.mxu0 %v845
        %904 = vmatprep.subr.mxu0 0.0
        %905 = vmatpush1.msra.mxu0 %v846
        %906 = vmatprep.subr.mxu0 0.0
        %907 = vmatpush1.msra.mxu0 %v847
        %908 = vmatprep.subr.mxu0 0.0
        %909 = vmatpush1.msra.mxu0 %v848
        %910 = vmatprep.subr.mxu0 0.0
        %911 = vmatpush1.msra.mxu0 %v849
        %912 = vmatprep.subr.mxu0 0.0
        %913 = vmatpush1.msra.mxu0 %v850
        %914 = vmatprep.subr.mxu0 0.0
        %915 = vmatpush1.msra.mxu0 %v851
        %916 = vmatprep.subr.mxu0 0.0
        %917 = vmatpush1.msra.mxu0 %v852
        %918 = vmatprep.subr.mxu0 0.0
        %919 = vmatpush1.msra.mxu0 %v853
        %920 = vmatprep.subr.mxu0 0.0
        %921 = vmatpush1.msra.mxu0 %v854
        %922 = vmatprep.subr.mxu0 0.0
        %923 = vmatpush1.msra.mxu0 %v855
        %924 = vmatprep.subr.mxu0 0.0
        %925 = vmatpush1.msra.mxu0 %v856
        %926 = vmatprep.subr.mxu0 0.0
        %927 = vmatpush1.msra.mxu0 %v857
        %928 = vmatprep.subr.mxu0 0.0
        %929 = vmatpush1.msra.mxu0 %v858
        %930 = vmatprep.mubr.f32.mxu0 %v589
        %931 = vmatmul.mubr.f32.gmra.mrb[0].mxu0 %v819
        %v932 = vpop.f32.mrb[0].mxu0
        %v933 = vadd.f32 %v864, %v932
        %v934 = vpop.f32.mrb[0].mxu0
        %935 = vmatprep.mubr.f32.mxu0 %v594
        %936 = vmatmul.mubr.f32.gmra.mrb[0].mxu0 %v820
        %v937 = vpop.f32.mrb[0].mxu0
        %v938 = vadd.f32 %v864, %v937
        %v939 = vpop.f32.mrb[0].mxu0
        %940 = vmatprep.mubr.f32.mxu0 %v599
        %941 = vmatmul.mubr.f32.gmra.mrb[0].mxu0 %v821
        %v942 = vpop.f32.mrb[0].mxu0
        %v943 = vadd.f32 %v864, %v942
        %v944 = vpop.f32.mrb[0].mxu0
        %945 = vmatprep.mubr.f32.mxu0 %v604
        %946 = vmatmul.mubr.f32.gmra.mrb[0].mxu0 %v822
        %v947 = vpop.f32.mrb[0].mxu0
        %v948 = vadd.f32 %v864, %v947
        %v949 = vpop.f32.mrb[0].mxu0
        %950 = vmatprep.mubr.f32.mxu0 %v609
        %951 = vmatmul.mubr.f32.gmra.mrb[0].mxu0 %v823
        %v952 = vpop.f32.mrb[0].mxu0
        %v953 = vadd.f32 %v864, %v952
        %v954 = vpop.f32.mrb[0].mxu0
        %955 = vmatprep.mubr.f32.mxu0 %v614
        %956 = vmatmul.mubr.f32.gmra.mrb[0].mxu0 %v824
        %v957 = vpop.f32.mrb[0].mxu0
        %v958 = vadd.f32 %v864, %v957
        %v959 = vpop.f32.mrb[0].mxu0
        %960 = vmatprep.mubr.f32.mxu0 %v619
        %961 = vmatmul.mubr.f32.gmra.mrb[0].mxu0 %v825
        %v962 = vpop.f32.mrb[0].mxu0
        %v963 = vadd.f32 %v864, %v962
        %v964 = vpop.f32.mrb[0].mxu0
        %965 = vmatprep.mubr.f32.mxu0 %v624
        %966 = vmatmul.mubr.f32.gmra.mrb[0].mxu0 %v826
        %v967 = vpop.f32.mrb[0].mxu0
        %v968 = vadd.f32 %v864, %v967
        %v969 = vpop.f32.mrb[0].mxu0
        %970 = vdwg.mxu0
        %v971 = vmax.f32 %v933, 0.0
        %v972 = vmax.f32 %v938, 0.0
        %v973 = vmax.f32 %v943, 0.0
        %v974 = vmax.f32 %v948, 0.0
        %v975 = vmax.f32 %v953, 0.0
        %v976 = vmax.f32 %v958, 0.0
        %v977 = vmax.f32 %v963, 0.0
        %v978 = vmax.f32 %v968, 0.0
        %v979 = vld [vmem:[#allocation10] sm:$0xff]
        %v980 = vld [vmem:[#allocation10 + $0x8] sm:$0xff]
        %v981 = vld [vmem:[#allocation10 + $0x10] sm:$0xff]
        %v982 = vld [vmem:[#allocation10 + $0x18] sm:$0xff]
        %v983 = vld [vmem:[#allocation10 + $0x20] sm:$0xff]
        %v984 = vld [vmem:[#allocation10 + $0x28] sm:$0xff]
        %v985 = vld [vmem:[#allocation10 + $0x30] sm:$0xff]
        %v986 = vld [vmem:[#allocation10 + $0x38] sm:$0xff]
        %v987 = vld [vmem:[#allocation10 + $0x40] sm:$0xff]
        %v988 = vld [vmem:[#allocation10 + $0x48] sm:$0xff]
        %v989 = vld [vmem:[#allocation10 + $0x50] sm:$0xff]
        %v990 = vld [vmem:[#allocation10 + $0x58] sm:$0xff]
        %v991 = vld [vmem:[#allocation10 + $0x60] sm:$0xff]
        %v992 = vld [vmem:[#allocation10 + $0x68] sm:$0xff]
        %v993 = vld [vmem:[#allocation10 + $0x70] sm:$0xff]
        %v994 = vld [vmem:[#allocation10 + $0x78] sm:$0xff]
        %995 = vmatprep.subr.mxu0 0.0
        %996 = vmatpush1.msra.mxu0 %v979
        %997 = vmatprep.subr.mxu0 0.0
        %998 = vmatpush1.msra.mxu0 %v980
        %999 = vmatprep.subr.mxu0 0.0
        %1000 = vmatpush1.msra.mxu0 %v981
        %1001 = vmatprep.subr.mxu0 0.0
        %1002 = vmatpush1.msra.mxu0 %v982
        %1003 = vmatprep.subr.mxu0 0.0
        %1004 = vmatpush1.msra.mxu0 %v983
        %1005 = vmatprep.subr.mxu0 0.0
        %1006 = vmatpush1.msra.mxu0 %v984
        %1007 = vmatprep.subr.mxu0 0.0
        %1008 = vmatpush1.msra.mxu0 %v985
        %1009 = vmatprep.subr.mxu0 0.0
        %1010 = vmatpush1.msra.mxu0 %v986
        %1011 = vmatprep.subr.mxu0 0.0
        %1012 = vmatpush1.msra.mxu0 %v987
        %1013 = vmatprep.subr.mxu0 0.0
        %1014 = vmatpush1.msra.mxu0 %v988
        %1015 = vmatprep.subr.mxu0 0.0
        %1016 = vmatpush1.msra.mxu0 %v989
        %1017 = vmatprep.subr.mxu0 0.0
        %1018 = vmatpush1.msra.mxu0 %v990
        %1019 = vmatprep.subr.mxu0 0.0
        %1020 = vmatpush1.msra.mxu0 %v991
        %1021 = vmatprep.subr.mxu0 0.0
        %1022 = vmatpush1.msra.mxu0 %v992
        %1023 = vmatprep.subr.mxu0 0.0
        %1024 = vmatpush1.msra.mxu0 %v993
        %1025 = vmatprep.subr.mxu0 0.0
        %1026 = vmatpush1.msra.mxu0 %v994
        %1027 = vmatprep.subr.mxu0 0.0
        %1028 = vmatpush1.msra.mxu0 0.0
        %1029 = vmatprep.subr.mxu0 0.0
        %1030 = vmatpush1.msra.mxu0 0.0
        %1031 = vmatprep.subr.mxu0 0.0
        %1032 = vmatpush1.msra.mxu0 0.0
        %1033 = vmatprep.subr.mxu0 0.0
        %1034 = vmatpush1.msra.mxu0 0.0
        %1035 = vmatprep.subr.mxu0 0.0
        %1036 = vmatpush1.msra.mxu0 0.0
        %1037 = vmatprep.subr.mxu0 0.0
        %1038 = vmatpush1.msra.mxu0 0.0
        %1039 = vmatprep.subr.mxu0 0.0
        %1040 = vmatpush1.msra.mxu0 0.0
        %1041 = vmatprep.subr.mxu0 0.0
        %1042 = vmatpush1.msra.mxu0 0.0
        %1043 = vmatprep.subr.mxu0 0.0
        %1044 = vmatpush1.msra.mxu0 0.0
        %1045 = vmatprep.subr.mxu0 0.0
        %1046 = vmatpush1.msra.mxu0 0.0
        %1047 = vmatprep.subr.mxu0 0.0
        %1048 = vmatpush1.msra.mxu0 0.0
        %1049 = vmatprep.subr.mxu0 0.0
        %1050 = vmatpush1.msra.mxu0 0.0
        %1051 = vmatprep.subr.mxu0 0.0
        %1052 = vmatpush1.msra.mxu0 0.0
        %1053 = vmatprep.subr.mxu0 0.0
        %1054 = vmatpush1.msra.mxu0 0.0
        %1055 = vmatprep.subr.mxu0 0.0
        %1056 = vmatpush1.msra.mxu0 0.0
        %1057 = vmatprep.subr.mxu0 0.0
        %1058 = vmatpush1.msra.mxu0 0.0
        %1059 = vmatprep.mubr.f32.mxu0 0.0
        %1060 = vmatmul.mubr.f32.gmra.mrb[0].mxu0 %v971
        %v1061 = vpop.f32.mrb[0].mxu0
        %v1062 = vadd.f32 0.0, %v1061
        %v1063 = vpop.f32.mrb[0].mxu0
        %1064 = vmatprep.mubr.f32.mxu0 0.0
        %1065 = vmatmul.mubr.f32.gmra.mrb[0].mxu0 %v972
        %v1066 = vpop.f32.mrb[0].mxu0
        %v1067 = vadd.f32 0.0, %v1066
        %v1068 = vpop.f32.mrb[0].mxu0
        %1069 = vmatprep.mubr.f32.mxu0 0.0
        %1070 = vmatmul.mubr.f32.gmra.mrb[0].mxu0 %v973
        %v1071 = vpop.f32.mrb[0].mxu0
        %v1072 = vadd.f32 0.0, %v1071
        %v1073 = vpop.f32.mrb[0].mxu0
        %1074 = vmatprep.mubr.f32.mxu0 0.0
        %1075 = vmatmul.mubr.f32.gmra.mrb[0].mxu0 %v974
        %v1076 = vpop.f32.mrb[0].mxu0
        %v1077 = vadd.f32 0.0, %v1076
        %v1078 = vpop.f32.mrb[0].mxu0
        %1079 = vmatprep.mubr.f32.mxu0 0.0
        %1080 = vmatmul.mubr.f32.gmra.mrb[0].mxu0 %v975
        %v1081 = vpop.f32.mrb[0].mxu0
        %v1082 = vadd.f32 0.0, %v1081
        %v1083 = vpop.f32.mrb[0].mxu0
        %1084 = vmatprep.mubr.f32.mxu0 0.0
        %1085 = vmatmul.mubr.f32.gmra.mrb[0].mxu0 %v976
        %v1086 = vpop.f32.mrb[0].mxu0
        %v1087 = vadd.f32 0.0, %v1086
        %v1088 = vpop.f32.mrb[0].mxu0
        %1089 = vmatprep.mubr.f32.mxu0 0.0
        %1090 = vmatmul.mubr.f32.gmra.mrb[0].mxu0 %v977
        %v1091 = vpop.f32.mrb[0].mxu0
        %v1092 = vadd.f32 0.0, %v1091
        %v1093 = vpop.f32.mrb[0].mxu0
        %1094 = vmatprep.mubr.f32.mxu0 0.0
        %1095 = vmatmul.mubr.f32.gmra.mrb[0].mxu0 %v978
        %v1096 = vpop.f32.mrb[0].mxu0
        %v1097 = vadd.f32 0.0, %v1096
        %v1098 = vpop.f32.mrb[0].mxu0
        %1099 = vdwg.mxu0
        %v1100 = vadd.f32 %v491, %v1062
        %v1101 = vadd.f32 %v492, %v1067
        %v1102 = vadd.f32 %v493, %v1072
        %v1103 = vadd.f32 %v494, %v1077
        %v1104 = vadd.f32 %v495, %v1082
        %v1105 = vadd.f32 %v496, %v1087
        %v1106 = vadd.f32 %v497, %v1092
        %v1107 = vadd.f32 %v498, %v1097
        %v1108 = vld [vmem:[%s8] sm:$0x1]
        %v1110 = vlaneseq
        %v1111 = vshrl.u32 %v1110, 7
        %v1112 = vsub.s32 0, %v1111
        %v1113 = vrot.slane %v1108, %v1112
        %v1115 = vadd.f32 %v1100, %v1113
        %v1116 = vadd.f32 %v1101, %v1113
        %v1117 = vadd.f32 %v1102, %v1113
        %v1118 = vadd.f32 %v1103, %v1113
        %v1119 = vadd.f32 %v1104, %v1113
        %v1120 = vadd.f32 %v1105, %v1113
        %v1121 = vadd.f32 %v1106, %v1113
        %v1122 = vadd.f32 %v1107, %v1113
        %v1123 = vmax.f32 %v1115, 0.0
        %v1124 = vmax.f32 %v1116, 0.0
        %v1125 = vmax.f32 %v1117, 0.0
        %v1126 = vmax.f32 %v1118, 0.0
        %v1127 = vmax.f32 %v1119, 0.0
        %v1128 = vmax.f32 %v1120, 0.0
        %v1129 = vmax.f32 %v1121, 0.0
        %v1130 = vmax.f32 %v1122, 0.0
        %1131 = vst [vmem:[%s485] sm:$0xff] %v1123
        %1132 = vst [vmem:[%s485 + $0x8] sm:$0xff] %v1124
        %1133 = vst [vmem:[%s485 + $0x10] sm:$0xff] %v1125
        %1134 = vst [vmem:[%s485 + $0x18] sm:$0xff] %v1126
        %1135 = vst [vmem:[%s485 + $0x20] sm:$0xff] %v1127
        %1136 = vst [vmem:[%s485 + $0x28] sm:$0xff] %v1128
        %1137 = vst [vmem:[%s485 + $0x30] sm:$0xff] %v1129
        %1138 = vst [vmem:[%s485 + $0x38] sm:$0xff] %v1130
        %s1139 = sand.u32 %s263, 1
        %s1140 = scalar_lea.sflag [#allocation4], %s1139
        %s1141 = sand.u32 %s263, 1
        %s1142 = smul.addr %s1141, 64
        %s1143 = scalar_lea.vmem [#allocation11], %s1142
        // Predicated region
        $region77: #{tpu_custom_call.1} parent=55 // pred_check
          %p1144 = pneg %p273
        $region78: #{tpu_custom_call.1} parent=55 // pred_check_branch
          %1146 = sbr.rel (%p1144) target = $region80
        $region79: #{tpu_custom_call.1} parent=55 // pred_region
          %s1147 = smul.u32 8, %s35
          %s1149 = ssub.s32 1024, 1024
          %1150 = vsyncadd %s1140, %s1149
          %s1151 = smul.addr %s34, 8
          %s1152 = sadd.s32 %s1147, %s1151
          %s1153 = smul.addr %s1152, 128
          %s1154 = scalar_lea.hbm %s9, %s1153
          %s1155 = sshll.u32 %s1143, 4
          %s1156 = int_to_ptr.vmem [resolvable:$true] %s1155
          %1161 = dma.vmem_to_hbm [thread:$0]  %s1156, 1024, %s1154, %s1140, 128, 128, 8
        $region80: #{tpu_custom_call.1} parent=55 // pred_fallthru
          _
      $region56: #{tpu_custom_call.1} parent=5 // pred_fallthru
        _
      %p1162 = scmp.le.s32.totalorder 2, %s25
      // Predicated region
      $region81: #{tpu_custom_call.1} parent=5 // pred_check
        %p1163 = pneg %p1162
      $region82: #{tpu_custom_call.1} parent=5 // pred_check_branch
        %1165 = sbr.rel (%p1163) target = $region84
      $region83: #{tpu_custom_call.1} parent=5 // pred_region
        %s1166 = ssub.s32 %s25, 2
        // Predicated region
        $region85: #{tpu_custom_call.1} parent=83 // pred_check
          %p1167 = pneg %p279
        $region86: #{tpu_custom_call.1} parent=83 // pred_check_branch
          %1169 = sbr.rel (%p1167) target = $region88
        $region87: #{tpu_custom_call.1} parent=83 // pred_region
          %s1170 = sand.u32 %s264, 1
          %s1171 = scalar_lea.sflag [#allocation4], %s1170
          %s1172 = sand.u32 %s264, 1
          %s1173 = smul.addr %s1172, 64
          %s1174 = scalar_lea.vmem [#allocation11], %s1173
          %1175 = dma.done %s1171, 1024
        $region88: #{tpu_custom_call.1} parent=83 // pred_fallthru
          _
      $region84: #{tpu_custom_call.1} parent=5 // pred_fallthru
        _
    $region6: #{tpu_custom_call.1} parent=1 // loop_footer
      %s29 = sadd.s32 1, %s25
    $region7: #{tpu_custom_call.1} parent=1 // loop_footer_branch
      %24 = sbr.rel target = $region3
    $region8: #{tpu_custom_call.1} parent=1 // loop_exit
      _
    %1176 = vsyncpa [#allocation3], 1
    %s1177 = scalar_lea.sflag [#allocation3], 1
    %1178 = vsyncpa %s1177, 1
    %1179 = vsyncpa [#allocation6], 1
    %s1180 = scalar_lea.sflag [#allocation6], 1
    %1181 = vsyncpa %s1180, 1
    %1182 = vsyncpa [#allocation9], 1
    %1183 = vsyncpa [#allocation4], 1
    %s1184 = scalar_lea.sflag [#allocation4], 1
    %1185 = vsyncpa %s1184, 1

</llo_original>
